<compile_context>
chip_gen: v7x
topology: tpu7x:2x2x1
jax: 0.10.0
libtpu: 0.0.40
codegen_flags: <defaults>
</compile_context>

<pallas_src>
import jax
import jax.numpy as jnp
import numpy as np
from jax.experimental import pallas as pl
from jax.experimental.pallas import tpu as pltpu

# ---------------- configuration (small, consistent with the module) ----------------
B = 4            # logical batch
BP = 8           # padded batch (full (8,128) f32 tile)
E = 32           # embedding_size
H = 32           # hidden_size
O = 64           # output_size (vocab)
NUM_LAYERS = 2
NUM_DIRS = 2

GL = 128                 # lanes per gate group (i/f/g/o); each = [fwd H | bwd H | 0-pad]
SL = 128                 # padded per-layer state width (>= NUM_DIRS * H)
ZW = 4 * GL              # fused gate pre-activation width per layer (512)

# slab row offsets (all multiples of 8 -> every in-kernel row slice is sublane-aligned)
R_W0 = 0                  # (256, 512) layer-0 block weight (x-part rows 0:128, h-part 128:256)
R_B0 = R_W0 + 2 * SL      # 256  (8, 512) layer-0 bias, pre-broadcast to 8 sublanes
R_W1 = R_B0 + 8           # 264  (256, 512) layer-1 block weight
R_B1 = R_W1 + 2 * SL      # 520  (8, 512) layer-1 bias
R_WFC = R_B1 + 8          # 528  (128, 512) fc weight (output lanes 0:128 used, rest zero)
R_BFC = R_WFC + SL        # 656  (8, 512) fc bias
SLAB_ROWS = R_BFC + 8     # 664


# ---------------------------------- Pallas kernel ----------------------------------
def _decoder_kernel(onehot_ref, h0_ref, c0_ref, slab_ref, logits_ref, h_ref, c_ref):
    """One decode step per grid point; state carried in the resident h/c output blocks."""
    t = pl.program_id(0)

    @pl.when(t == 0)
    def _init():
        # seed the resident state accumulators from the (resident) initial state inputs
        h_ref[...] = h0_ref[...]
        c_ref[...] = c0_ref[...]

    def lstm_layer(x, layer, r_w, r_b):
        # x / h_prev / c_prev: (BP, SL) in padded layout [fwd H | bwd H | zeros]
        h_prev = h_ref[layer]
        c_prev = c_ref[layer]
        # two K=128 MXU dots summed (no lane concat); bias rows pre-broadcast to 8 sublanes
        z = (jnp.dot(x, slab_ref[r_w:r_w + SL, :],
                     preferred_element_type=jnp.float32)
             + jnp.dot(h_prev, slab_ref[r_w + SL:r_w + 2 * SL, :],
                       preferred_element_type=jnp.float32)
             + slab_ref[r_b:r_b + BP, :])                       # (BP, 512)
        # gate groups are 128-lane aligned -> free vreg-boundary slices
        i = jax.nn.sigmoid(z[:, 0 * GL:1 * GL])
        f = jax.nn.sigmoid(z[:, 1 * GL:2 * GL])
        g = jnp.tanh(z[:, 2 * GL:3 * GL])
        o = jax.nn.sigmoid(z[:, 3 * GL:4 * GL])
        c_new = f * c_prev + i * g        # pad lanes: 0.5*0 + 0.5*0 = 0
        h_new = o * jnp.tanh(c_new)       # pad lanes stay exactly 0
        h_ref[layer] = h_new
        c_ref[layer] = c_new
        return h_new

    # layer 0 (both directions fused, embedding folded into the x-weight block);
    # layer 1 consumes layer-0 output directly as a value
    h0 = lstm_layer(onehot_ref[0], 0, R_W0, R_B0)
    h1 = lstm_layer(h0, 1, R_W1, R_B1)

    # final projection: full 512-wide dot, then a vreg-boundary value slice to 128 lanes
    z_fc = (jnp.dot(h1, slab_ref[R_WFC:R_WFC + SL, :],
                    preferred_element_type=jnp.float32)
            + slab_ref[R_BFC:R_BFC + BP, :])                    # (BP, 512)
    logits_ref[0] = z_fc[:, 0:SL]                               # lane-dense (BP, 128) store


def _decoder_steps(T):
    """Build the gridded pallas_call for T decode steps (slab/state DMA'd once)."""
    grid_spec = pltpu.PrefetchScalarGridSpec(
        num_scalar_prefetch=0,
        grid=(T,),
        in_specs=[
            pl.BlockSpec((1, BP, SL), lambda t: (t, 0, 0)),               # per-step one-hot
            pl.BlockSpec((NUM_LAYERS, BP, SL), lambda t: (0, 0, 0)),      # h init (resident)
            pl.BlockSpec((NUM_LAYERS, BP, SL), lambda t: (0, 0, 0)),      # c init (resident)
            pl.BlockSpec((SLAB_ROWS, ZW), lambda t: (0, 0)),              # weight slab (resident)
        ],
        out_specs=[
            pl.BlockSpec((1, BP, SL), lambda t: (t, 0, 0)),               # per-step logits
            pl.BlockSpec((NUM_LAYERS, BP, SL), lambda t: (0, 0, 0)),      # h state (resident)
            pl.BlockSpec((NUM_LAYERS, BP, SL), lambda t: (0, 0, 0)),      # c state (resident)
        ],
    )
    return pl.pallas_call(
        _decoder_kernel,
        grid_spec=grid_spec,
        out_shape=(
            jax.ShapeDtypeStruct((T, BP, SL), jnp.float32),
            jax.ShapeDtypeStruct((NUM_LAYERS, BP, SL), jnp.float32),
            jax.ShapeDtypeStruct((NUM_LAYERS, BP, SL), jnp.float32),
        ),
        input_output_aliases={1: 1, 2: 2},    # hidden/cell round-trip in place
        compiler_params=pltpu.CompilerParams(
            dimension_semantics=("arbitrary",),   # state carried across steps -> sequential
        ),
    )


# ------------------------- one-time parameter packing (init) ------------------------
def pack_decoder_params(params):
    """Pack embedding + LSTM + fc weights/biases into one lane-dense f32 slab."""

    def gate_cols(wf_t, wb_t):
        # wf_t / wb_t: (K, 4H), PyTorch gate order (i,f,g,o) along columns.
        # -> (K, 512): each gate in its own 128-lane group, [fwd H | bwd H | zeros].
        k_dim = wf_t.shape[0]
        out = jnp.zeros((k_dim, ZW), jnp.float32)
        for gi in range(4):
            out = out.at[:, gi * GL:gi * GL + H].set(wf_t[:, gi * H:(gi + 1) * H])
            out = out.at[:, gi * GL + H:gi * GL + 2 * H].set(wb_t[:, gi * H:(gi + 1) * H])
        return out

    zeros_hh = jnp.zeros((H, 4 * H), jnp.float32)

    # ----- layer 0: fold the embedding into the input projection -----
    wx0 = gate_cols(params["wih_l0"].T, params["wih_l0r"].T)              # (E, 512)
    w0 = jnp.zeros((2 * SL, ZW), jnp.float32)
    w0 = w0.at[0:O, :].set(params["embedding"] @ wx0)                     # one-hot rows
    w0 = w0.at[SL:SL + H, :].set(gate_cols(params["whh_l0"].T, zeros_hh))
    w0 = w0.at[SL + H:SL + 2 * H, :].set(gate_cols(zeros_hh, params["whh_l0r"].T))
    b0 = gate_cols((params["bih_l0"] + params["bhh_l0"]).reshape(1, -1),
                   (params["bih_l0r"] + params["bhh_l0r"]).reshape(1, -1))

    # ----- layer 1 -----
    w1 = jnp.zeros((2 * SL, ZW), jnp.float32)
    w1 = w1.at[0:NUM_DIRS * H, :].set(gate_cols(params["wih_l1"].T, params["wih_l1r"].T))
    w1 = w1.at[SL:SL + H, :].set(gate_cols(params["whh_l1"].T, zeros_hh))
    w1 = w1.at[SL + H:SL + 2 * H, :].set(gate_cols(zeros_hh, params["whh_l1r"].T))
    b1 = gate_cols((params["bih_l1"] + params["bhh_l1"]).reshape(1, -1),
                   (params["bih_l1r"] + params["bhh_l1r"]).reshape(1, -1))

    # ----- fc: Linear(2H -> O), output lanes padded to 128 (rest of the 512 are zero) -----
    wfc = jnp.zeros((SL, ZW), jnp.float32)
    wfc = wfc.at[0:NUM_DIRS * H, 0:O].set(params["w_fc"].T)
    bfc = jnp.zeros((1, ZW), jnp.float32).at[0, 0:O].set(params["b_fc"])

    slab = jnp.zeros((SLAB_ROWS, ZW), jnp.float32)
    slab = slab.at[R_W0:R_W0 + 2 * SL].set(w0)
    slab = slab.at[R_B0:R_B0 + BP].set(jnp.tile(b0, (BP, 1)))     # biases pre-broadcast
    slab = slab.at[R_W1:R_W1 + 2 * SL].set(w1)
    slab = slab.at[R_B1:R_B1 + BP].set(jnp.tile(b1, (BP, 1)))
    slab = slab.at[R_WFC:R_WFC + SL].set(wfc)
    slab = slab.at[R_BFC:R_BFC + BP].set(jnp.tile(bfc, (BP, 1)))
    return jax.device_put(slab)


# ------------------------------------ wrapper --------------------------------------
def _state_to_padded(s):
    # PyTorch (num_layers*num_dirs, B, H) -> lane-dense (num_layers, BP, SL)
    s = s.reshape(NUM_LAYERS, NUM_DIRS, B, H).transpose(0, 2, 1, 3)
    s = s.reshape(NUM_LAYERS, B, NUM_DIRS * H)
    return jnp.pad(s, ((0, 0), (0, BP - B), (0, SL - NUM_DIRS * H)))


def _padded_to_state(p):
    # lane-dense (num_layers, BP, SL) -> PyTorch (num_layers*num_dirs, B, H)
    s = p[:, :B, :NUM_DIRS * H].reshape(NUM_LAYERS, B, NUM_DIRS, H)
    return s.transpose(0, 2, 1, 3).reshape(NUM_LAYERS * NUM_DIRS, B, H)


@jax.jit
def decoder_forward(source, hidden, cell, slab):
    """Mirrors Decoder.forward in eval mode.

    source: (B,) -> one step, returns logits (B, O) (exact module semantics), or
    source: (T, B) -> T fused decode steps in one kernel call, returns (T, B, O).
    """
    single = source.ndim == 1
    src = source.astype(jnp.int32).reshape(-1, B)                        # (T, B)
    T = src.shape[0]

    # layout glue happens ONCE per sequence (not per step)
    onehot = jax.nn.one_hot(src, SL, dtype=jnp.float32)                  # (T, B, 128)
    onehot = jnp.pad(onehot, ((0, 0), (0, BP - B), (0, 0)))              # (T, BP, 128)
    h_pad = _state_to_padded(hidden)
    c_pad = _state_to_padded(cell)

    logits_pad, h_pad_new, c_pad_new = _decoder_steps(T)(onehot, h_pad, c_pad, slab)

    logits = logits_pad[:, :B, :O]
    if single:
        logits = logits[0]
    return logits, _padded_to_state(h_pad_new), _padded_to_state(c_pad_new)


# -------------------------------- pure-JAX reference --------------------------------
def decoder_reference(source, hidden, cell, params):
    x = params["embedding"][source]

    def cell_ref(x, h, c, wih, whh, bih, bhh):
        z = x @ wih.T + h @ whh.T + bih + bhh
        i, f, g, o = jnp.split(z, 4, axis=-1)
        i, f, o = jax.nn.sigmoid(i), jax.nn.sigmoid(f), jax.nn.sigmoid(o)
        g = jnp.tanh(g)
        c_new = f * c + i * g
        return o * jnp.tanh(c_new), c_new

    h0f, c0f = cell_ref(x, hidden[0], cell[0], params["wih_l0"], params["whh_l0"],
                        params["bih_l0"], params["bhh_l0"])
    h0b, c0b = cell_ref(x, hidden[1], cell[1], params["wih_l0r"], params["whh_l0r"],
                        params["bih_l0r"], params["bhh_l0r"])
    l0 = jnp.concatenate([h0f, h0b], axis=-1)
    h1f, c1f = cell_ref(l0, hidden[2], cell[2], params["wih_l1"], params["whh_l1"],
                        params["bih_l1"], params["bhh_l1"])
    h1b, c1b = cell_ref(l0, hidden[3], cell[3], params["wih_l1r"], params["whh_l1r"],
                        params["bih_l1r"], params["bhh_l1r"])
    top = jnp.concatenate([h1f, h1b], axis=-1)
    logits = top @ params["w_fc"].T + params["b_fc"]
    h_new = jnp.stack([h0f, h0b, h1f, h1b])
    c_new = jnp.stack([c0f, c0b, c1f, c1b])
    return logits, h_new, c_new


def decoder_reference_steps(sources, hidden, cell, params):
    logits_all = []
    h, c = hidden, cell
    for t in range(sources.shape[0]):
        lg, h, c = decoder_reference(sources[t], h, c, params)
        logits_all.append(lg)
    return jnp.stack(logits_all), h, c


# ------------------------------------- main -----------------------------------------
def _init_params(key):
    ks = jax.random.split(key, 24)
    s = 1.0 / np.sqrt(H)
    u = lambda k, shape: jax.random.uniform(k, shape, jnp.float32, -s, s)
    p = {
        "embedding": jax.random.normal(ks[0], (O, E), jnp.float32),
        # LSTM layer 0 (input size E), forward + reverse
        "wih_l0": u(ks[1], (4 * H, E)),  "whh_l0": u(ks[2], (4 * H, H)),
        "bih_l0": u(ks[3], (4 * H,)),    "bhh_l0": u(ks[4], (4 * H,)),
        "wih_l0r": u(ks[5], (4 * H, E)), "whh_l0r": u(ks[6], (4 * H, H)),
        "bih_l0r": u(ks[7], (4 * H,)),   "bhh_l0r": u(ks[8], (4 * H,)),
        # LSTM layer 1 (input size 2H), forward + reverse
        "wih_l1": u(ks[9], (4 * H, 2 * H)),  "whh_l1": u(ks[10], (4 * H, H)),
        "bih_l1": u(ks[11], (4 * H,)),       "bhh_l1": u(ks[12], (4 * H,)),
        "wih_l1r": u(ks[13], (4 * H, 2 * H)), "whh_l1r": u(ks[14], (4 * H, H)),
        "bih_l1r": u(ks[15], (4 * H,)),      "bhh_l1r": u(ks[16], (4 * H,)),
        # final fc: Linear(2H -> O)
        "w_fc": u(ks[17], (O, 2 * H)), "b_fc": u(ks[18], (O,)),
        # NOTE: the Attention submodule's params exist in __init__ but are unused in forward.
    }
    return p


if __name__ == "__main__":
    key = jax.random.PRNGKey(0)
    kp, kd = jax.random.split(key)
    params = _init_params(kp)
    slab = pack_decoder_params(params)   # one-time packing: no per-call weight prep

    k1, k2, k3 = jax.random.split(kd, 3)
    T = 8
    sources = jax.random.randint(k1, (T, B), 0, O, dtype=jnp.int32)              # (T, B)
    hidden = jax.random.normal(k2, (NUM_LAYERS * NUM_DIRS, B, H), jnp.float32)   # (4, B, H)
    cell = jax.random.normal(k3, (NUM_LAYERS * NUM_DIRS, B, H), jnp.float32)     # (4, B, H)

    # --- single step: exact Decoder.forward semantics ---
    logits, h_new, c_new = jax.block_until_ready(
        decoder_forward(sources[0], hidden, cell, slab))
    ref_logits, ref_h, ref_c = decoder_reference(sources[0], hidden, cell, params)
    assert logits.shape == (B, O) and h_new.shape == (4, B, H) and c_new.shape == (4, B, H)
    np.testing.assert_allclose(np.asarray(logits), np.asarray(ref_logits), rtol=1e-5, atol=1e-5)
    np.testing.assert_allclose(np.asarray(h_new), np.asarray(ref_h), rtol=1e-5, atol=1e-5)
    np.testing.assert_allclose(np.asarray(c_new), np.asarray(ref_c), rtol=1e-5, atol=1e-5)

    # --- T fused decode steps in one gridded kernel call (amortized slab DMA) ---
    logits_T, h_T, c_T = jax.block_until_ready(
        decoder_forward(sources, hidden, cell, slab))
    ref_logits_T, ref_h_T, ref_c_T = decoder_reference_steps(sources, hidden, cell, params)
    assert logits_T.shape == (T, B, O)
    np.testing.assert_allclose(np.asarray(logits_T), np.asarray(ref_logits_T), rtol=1e-4, atol=1e-4)
    np.testing.assert_allclose(np.asarray(h_T), np.asarray(ref_h_T), rtol=1e-4, atol=1e-4)
    np.testing.assert_allclose(np.asarray(c_T), np.asarray(ref_c_T), rtol=1e-4, atol=1e-4)

    print("KERNEL_OK")
</pallas_src>

<mosaic_0001>
module attributes {stable_mosaic.version = 11 : i64} {
  func.func @_decoder_kernel(%arg0: i32, %arg1: memref<1x8x128xf32, #tpu.memory_space<vmem>>, %arg2: memref<2x8x128xf32, #tpu.memory_space<vmem>>, %arg3: memref<2x8x128xf32, #tpu.memory_space<vmem>>, %arg4: memref<664x512xf32, #tpu.memory_space<vmem>>, %arg5: memref<1x8x128xf32, #tpu.memory_space<vmem>>, %arg6: memref<2x8x128xf32, #tpu.memory_space<vmem>>, %arg7: memref<2x8x128xf32, #tpu.memory_space<vmem>>) attributes {dimension_semantics = [#tpu.dimension_semantics<arbitrary>], iteration_bounds = array<i64: 1>, scalar_prefetch = 0 : i64, scratch_operands = 0 : i64, tpu.core_type = #tpu.core_type<tc>, window_params = [{transform_indices = @transform_0, window_bounds = array<i64: 1, 8, 128>}, {pipeline_mode = #tpu.pipeline_mode<synchronous>, transform_indices = @transform_1, window_bounds = array<i64: 2, 8, 128>}, {pipeline_mode = #tpu.pipeline_mode<synchronous>, transform_indices = @transform_2, window_bounds = array<i64: 2, 8, 128>}, {pipeline_mode = #tpu.pipeline_mode<synchronous>, transform_indices = @transform_3, window_bounds = array<i64: 664, 512>}, {transform_indices = @transform_4, window_bounds = array<i64: 1, 8, 128>}, {pipeline_mode = #tpu.pipeline_mode<synchronous>, transform_indices = @transform_5, window_bounds = array<i64: 2, 8, 128>}, {pipeline_mode = #tpu.pipeline_mode<synchronous>, transform_indices = @transform_6, window_bounds = array<i64: 2, 8, 128>}]} {
    %c0_i32 = arith.constant 0 : i32
    %0 = arith.cmpi eq, %arg0, %c0_i32 : i32
    %1 = arith.extui %0 : i1 to i32
    %c0_i32_0 = arith.constant 0 : i32
    %2 = arith.cmpi ne, %1, %c0_i32_0 : i32
    scf.if %2 {
      %c0_48 = arith.constant 0 : index
      %c0_49 = arith.constant 0 : index
      %c0_50 = arith.constant 0 : index
      %97 = vector.load %arg2[%c0_48, %c0_49, %c0_50] : memref<2x8x128xf32, #tpu.memory_space<vmem>>, vector<2x8x128xf32>
      %c0_51 = arith.constant 0 : index
      %c0_52 = arith.constant 0 : index
      %c0_53 = arith.constant 0 : index
      %98 = vector.load %arg6[%c0_51, %c0_52, %c0_53] : memref<2x8x128xf32, #tpu.memory_space<vmem>>, vector<2x8x128xf32>
      tpu.vector_store %arg6[%c0_51, %c0_52, %c0_53], %97 {strides = array<i32>} : memref<2x8x128xf32, #tpu.memory_space<vmem>>, vector<2x8x128xf32>,
      %c0_54 = arith.constant 0 : index
      %c0_55 = arith.constant 0 : index
      %c0_56 = arith.constant 0 : index
      %99 = vector.load %arg3[%c0_54, %c0_55, %c0_56] : memref<2x8x128xf32, #tpu.memory_space<vmem>>, vector<2x8x128xf32>
      %c0_57 = arith.constant 0 : index
      %c0_58 = arith.constant 0 : index
      %c0_59 = arith.constant 0 : index
      %100 = vector.load %arg7[%c0_57, %c0_58, %c0_59] : memref<2x8x128xf32, #tpu.memory_space<vmem>>, vector<2x8x128xf32>
      tpu.vector_store %arg7[%c0_57, %c0_58, %c0_59], %99 {strides = array<i32>} : memref<2x8x128xf32, #tpu.memory_space<vmem>>, vector<2x8x128xf32>,
    } else {
    }
    %c0 = arith.constant 0 : index
    %c0_1 = arith.constant 0 : index
    %c0_2 = arith.constant 0 : index
    %3 = vector.load %arg1[%c0, %c0_1, %c0_2] : memref<1x8x128xf32, #tpu.memory_space<vmem>>, vector<1x8x128xf32>
    %4 = vector.shape_cast %3 : vector<1x8x128xf32> to vector<8x128xf32>
    %c0_3 = arith.constant 0 : index
    %c0_4 = arith.constant 0 : index
    %c0_5 = arith.constant 0 : index
    %5 = vector.load %arg6[%c0_3, %c0_4, %c0_5] : memref<2x8x128xf32, #tpu.memory_space<vmem>>, vector<1x8x128xf32>
    %6 = vector.shape_cast %5 : vector<1x8x128xf32> to vector<8x128xf32>
    %c0_6 = arith.constant 0 : index
    %c0_7 = arith.constant 0 : index
    %c0_8 = arith.constant 0 : index
    %7 = vector.load %arg7[%c0_6, %c0_7, %c0_8] : memref<2x8x128xf32, #tpu.memory_space<vmem>>, vector<1x8x128xf32>
    %8 = vector.shape_cast %7 : vector<1x8x128xf32> to vector<8x128xf32>
    %c0_9 = arith.constant 0 : index
    %c0_10 = arith.constant 0 : index
    %9 = vector.load %arg4[%c0_9, %c0_10] : memref<664x512xf32, #tpu.memory_space<vmem>>, vector<128x512xf32>
    %cst = arith.constant dense<0.000000e+00> : vector<8x512xf32>
    %10 = tpu.matmul %4, %9, %cst {dimension_numbers = #tpu.dot_dimension_numbers<[1], [0], [0], [1], [0, 0, 1, 1], [], []>} : vector<8x128xf32>, vector<128x512xf32>, vector<8x512xf32> -> vector<8x512xf32>
    %c128 = arith.constant 128 : index
    %c0_11 = arith.constant 0 : index
    %11 = vector.load %arg4[%c128, %c0_11] : memref<664x512xf32, #tpu.memory_space<vmem>>, vector<128x512xf32>
    %cst_12 = arith.constant dense<0.000000e+00> : vector<8x512xf32>
    %12 = tpu.matmul %6, %11, %cst_12 {dimension_numbers = #tpu.dot_dimension_numbers<[1], [0], [0], [1], [0, 0, 1, 1], [], []>} : vector<8x128xf32>, vector<128x512xf32>, vector<8x512xf32> -> vector<8x512xf32>
    %13 = arith.addf %10, %12 : vector<8x512xf32>
    %c256 = arith.constant 256 : index
    %c0_13 = arith.constant 0 : index
    %14 = vector.load %arg4[%c256, %c0_13] : memref<664x512xf32, #tpu.memory_space<vmem>>, vector<8x512xf32>
    %15 = arith.addf %13, %14 : vector<8x512xf32>
    %16 = vector.extract_strided_slice %15 {offsets = [0, 0], sizes = [8, 128], strides = [1, 1]} : vector<8x512xf32> to vector<8x128xf32>
    %17 = arith.negf %16 : vector<8x128xf32>
    %18 = math.exp %17 : vector<8x128xf32>
    %cst_14 = arith.constant 1.000000e+00 : f32
    %19 = vector.broadcast %cst_14 : f32 to vector<8x128xf32>
    %20 = arith.addf %19, %18 : vector<8x128xf32>
    %21 = arith.divf %19, %20 : vector<8x128xf32>
    %22 = vector.extract_strided_slice %15 {offsets = [0, 128], sizes = [8, 128], strides = [1, 1]} : vector<8x512xf32> to vector<8x128xf32>
    %23 = arith.negf %22 : vector<8x128xf32>
    %24 = math.exp %23 : vector<8x128xf32>
    %cst_15 = arith.constant 1.000000e+00 : f32
    %25 = vector.broadcast %cst_15 : f32 to vector<8x128xf32>
    %26 = arith.addf %25, %24 : vector<8x128xf32>
    %27 = arith.divf %25, %26 : vector<8x128xf32>
    %28 = vector.extract_strided_slice %15 {offsets = [0, 256], sizes = [8, 128], strides = [1, 1]} : vector<8x512xf32> to vector<8x128xf32>
    %29 = math.tanh %28 : vector<8x128xf32>
    %30 = vector.extract_strided_slice %15 {offsets = [0, 384], sizes = [8, 128], strides = [1, 1]} : vector<8x512xf32> to vector<8x128xf32>
    %31 = arith.negf %30 : vector<8x128xf32>
    %32 = math.exp %31 : vector<8x128xf32>
    %cst_16 = arith.constant 1.000000e+00 : f32
    %33 = vector.broadcast %cst_16 : f32 to vector<8x128xf32>
    %34 = arith.addf %33, %32 : vector<8x128xf32>
    %35 = arith.divf %33, %34 : vector<8x128xf32>
    %36 = arith.mulf %27, %8 : vector<8x128xf32>
    %37 = arith.mulf %21, %29 : vector<8x128xf32>
    %38 = arith.addf %36, %37 : vector<8x128xf32>
    %39 = math.tanh %38 : vector<8x128xf32>
    %40 = arith.mulf %35, %39 : vector<8x128xf32>
    %c0_17 = arith.constant 0 : index
    %c0_18 = arith.constant 0 : index
    %c0_19 = arith.constant 0 : index
    %41 = vector.load %arg6[%c0_17, %c0_18, %c0_19] : memref<2x8x128xf32, #tpu.memory_space<vmem>>, vector<1x8x128xf32>
    %42 = vector.shape_cast %41 : vector<1x8x128xf32> to vector<8x128xf32>
    %43 = vector.shape_cast %40 : vector<8x128xf32> to vector<1x8x128xf32>
    tpu.vector_store %arg6[%c0_17, %c0_18, %c0_19], %43 {strides = array<i32>} : memref<2x8x128xf32, #tpu.memory_space<vmem>>, vector<1x8x128xf32>,
    %c0_20 = arith.constant 0 : index
    %c0_21 = arith.constant 0 : index
    %c0_22 = arith.constant 0 : index
    %44 = vector.load %arg7[%c0_20, %c0_21, %c0_22] : memref<2x8x128xf32, #tpu.memory_space<vmem>>, vector<1x8x128xf32>
    %45 = vector.shape_cast %44 : vector<1x8x128xf32> to vector<8x128xf32>
    %46 = vector.shape_cast %38 : vector<8x128xf32> to vector<1x8x128xf32>
    tpu.vector_store %arg7[%c0_20, %c0_21, %c0_22], %46 {strides = array<i32>} : memref<2x8x128xf32, #tpu.memory_space<vmem>>, vector<1x8x128xf32>,
    %c1 = arith.constant 1 : index
    %c0_23 = arith.constant 0 : index
    %c0_24 = arith.constant 0 : index
    %47 = vector.load %arg6[%c1, %c0_23, %c0_24] : memref<2x8x128xf32, #tpu.memory_space<vmem>>, vector<1x8x128xf32>
    %48 = vector.shape_cast %47 : vector<1x8x128xf32> to vector<8x128xf32>
    %c1_25 = arith.constant 1 : index
    %c0_26 = arith.constant 0 : index
    %c0_27 = arith.constant 0 : index
    %49 = vector.load %arg7[%c1_25, %c0_26, %c0_27] : memref<2x8x128xf32, #tpu.memory_space<vmem>>, vector<1x8x128xf32>
    %50 = vector.shape_cast %49 : vector<1x8x128xf32> to vector<8x128xf32>
    %c264 = arith.constant 264 : index
    %c0_28 = arith.constant 0 : index
    %51 = vector.load %arg4[%c264, %c0_28] : memref<664x512xf32, #tpu.memory_space<vmem>>, vector<128x512xf32>
    %cst_29 = arith.constant dense<0.000000e+00> : vector<8x512xf32>
    %52 = tpu.matmul %40, %51, %cst_29 {dimension_numbers = #tpu.dot_dimension_numbers<[1], [0], [0], [1], [0, 0, 1, 1], [], []>} : vector<8x128xf32>, vector<128x512xf32>, vector<8x512xf32> -> vector<8x512xf32>
    %c392 = arith.constant 392 : index
    %c0_30 = arith.constant 0 : index
    %53 = vector.load %arg4[%c392, %c0_30] : memref<664x512xf32, #tpu.memory_space<vmem>>, vector<128x512xf32>
    %cst_31 = arith.constant dense<0.000000e+00> : vector<8x512xf32>
    %54 = tpu.matmul %48, %53, %cst_31 {dimension_numbers = #tpu.dot_dimension_numbers<[1], [0], [0], [1], [0, 0, 1, 1], [], []>} : vector<8x128xf32>, vector<128x512xf32>, vector<8x512xf32> -> vector<8x512xf32>
    %55 = arith.addf %52, %54 : vector<8x512xf32>
    %c520 = arith.constant 520 : index
    %c0_32 = arith.constant 0 : index
    %56 = vector.load %arg4[%c520, %c0_32] : memref<664x512xf32, #tpu.memory_space<vmem>>, vector<8x512xf32>
    %57 = arith.addf %55, %56 : vector<8x512xf32>
    %58 = vector.extract_strided_slice %57 {offsets = [0, 0], sizes = [8, 128], strides = [1, 1]} : vector<8x512xf32> to vector<8x128xf32>
    %59 = arith.negf %58 : vector<8x128xf32>
    %60 = math.exp %59 : vector<8x128xf32>
    %cst_33 = arith.constant 1.000000e+00 : f32
    %61 = vector.broadcast %cst_33 : f32 to vector<8x128xf32>
    %62 = arith.addf %61, %60 : vector<8x128xf32>
    %63 = arith.divf %61, %62 : vector<8x128xf32>
    %64 = vector.extract_strided_slice %57 {offsets = [0, 128], sizes = [8, 128], strides = [1, 1]} : vector<8x512xf32> to vector<8x128xf32>
    %65 = arith.negf %64 : vector<8x128xf32>
    %66 = math.exp %65 : vector<8x128xf32>
    %cst_34 = arith.constant 1.000000e+00 : f32
    %67 = vector.broadcast %cst_34 : f32 to vector<8x128xf32>
    %68 = arith.addf %67, %66 : vector<8x128xf32>
    %69 = arith.divf %67, %68 : vector<8x128xf32>
    %70 = vector.extract_strided_slice %57 {offsets = [0, 256], sizes = [8, 128], strides = [1, 1]} : vector<8x512xf32> to vector<8x128xf32>
    %71 = math.tanh %70 : vector<8x128xf32>
    %72 = vector.extract_strided_slice %57 {offsets = [0, 384], sizes = [8, 128], strides = [1, 1]} : vector<8x512xf32> to vector<8x128xf32>
    %73 = arith.negf %72 : vector<8x128xf32>
    %74 = math.exp %73 : vector<8x128xf32>
    %cst_35 = arith.constant 1.000000e+00 : f32
    %75 = vector.broadcast %cst_35 : f32 to vector<8x128xf32>
    %76 = arith.addf %75, %74 : vector<8x128xf32>
    %77 = arith.divf %75, %76 : vector<8x128xf32>
    %78 = arith.mulf %69, %50 : vector<8x128xf32>
    %79 = arith.mulf %63, %71 : vector<8x128xf32>
    %80 = arith.addf %78, %79 : vector<8x128xf32>
    %81 = math.tanh %80 : vector<8x128xf32>
    %82 = arith.mulf %77, %81 : vector<8x128xf32>
    %c1_36 = arith.constant 1 : index
    %c0_37 = arith.constant 0 : index
    %c0_38 = arith.constant 0 : index
    %83 = vector.load %arg6[%c1_36, %c0_37, %c0_38] : memref<2x8x128xf32, #tpu.memory_space<vmem>>, vector<1x8x128xf32>
    %84 = vector.shape_cast %83 : vector<1x8x128xf32> to vector<8x128xf32>
    %85 = vector.shape_cast %82 : vector<8x128xf32> to vector<1x8x128xf32>
    tpu.vector_store %arg6[%c1_36, %c0_37, %c0_38], %85 {strides = array<i32>} : memref<2x8x128xf32, #tpu.memory_space<vmem>>, vector<1x8x128xf32>,
    %c1_39 = arith.constant 1 : index
    %c0_40 = arith.constant 0 : index
    %c0_41 = arith.constant 0 : index
    %86 = vector.load %arg7[%c1_39, %c0_40, %c0_41] : memref<2x8x128xf32, #tpu.memory_space<vmem>>, vector<1x8x128xf32>
    %87 = vector.shape_cast %86 : vector<1x8x128xf32> to vector<8x128xf32>
    %88 = vector.shape_cast %80 : vector<8x128xf32> to vector<1x8x128xf32>
    tpu.vector_store %arg7[%c1_39, %c0_40, %c0_41], %88 {strides = array<i32>} : memref<2x8x128xf32, #tpu.memory_space<vmem>>, vector<1x8x128xf32>,
    %c528 = arith.constant 528 : index
    %c0_42 = arith.constant 0 : index
    %89 = vector.load %arg4[%c528, %c0_42] : memref<664x512xf32, #tpu.memory_space<vmem>>, vector<128x512xf32>
    %cst_43 = arith.constant dense<0.000000e+00> : vector<8x512xf32>
    %90 = tpu.matmul %82, %89, %cst_43 {dimension_numbers = #tpu.dot_dimension_numbers<[1], [0], [0], [1], [0, 0, 1, 1], [], []>} : vector<8x128xf32>, vector<128x512xf32>, vector<8x512xf32> -> vector<8x512xf32>
    %c656 = arith.constant 656 : index
    %c0_44 = arith.constant 0 : index
    %91 = vector.load %arg4[%c656, %c0_44] : memref<664x512xf32, #tpu.memory_space<vmem>>, vector<8x512xf32>
    %92 = arith.addf %90, %91 : vector<8x512xf32>
    %93 = vector.extract_strided_slice %92 {offsets = [0, 0], sizes = [8, 128], strides = [1, 1]} : vector<8x512xf32> to vector<8x128xf32>
    %c0_45 = arith.constant 0 : index
    %c0_46 = arith.constant 0 : index
    %c0_47 = arith.constant 0 : index
    %94 = vector.load %arg5[%c0_45, %c0_46, %c0_47] : memref<1x8x128xf32, #tpu.memory_space<vmem>>, vector<1x8x128xf32>
    %95 = vector.shape_cast %94 : vector<1x8x128xf32> to vector<8x128xf32>
    %96 = vector.shape_cast %93 : vector<8x128xf32> to vector<1x8x128xf32>
    tpu.vector_store %arg5[%c0_45, %c0_46, %c0_47], %96 {strides = array<i32>} : memref<1x8x128xf32, #tpu.memory_space<vmem>>, vector<1x8x128xf32>,
    return
  }
  func.func @transform_0(%arg0: i32) -> (i32, i32, i32) {
    %c0_i32 = arith.constant 0 : i32
    %c0_i32_0 = arith.constant 0 : i32
    %c0_i32_1 = arith.constant 0 : i32
    return %arg0, %c0_i32, %c0_i32_0 : i32, i32, i32
  }
  func.func @transform_1(%arg0: i32) -> (i32, i32, i32) {
    %c0_i32 = arith.constant 0 : i32
    %c0_i32_0 = arith.constant 0 : i32
    %c0_i32_1 = arith.constant 0 : i32
    %c0_i32_2 = arith.constant 0 : i32
    return %c0_i32, %c0_i32_0, %c0_i32_1 : i32, i32, i32
  }
  func.func @transform_2(%arg0: i32) -> (i32, i32, i32) {
    %c0_i32 = arith.constant 0 : i32
    %c0_i32_0 = arith.constant 0 : i32
    %c0_i32_1 = arith.constant 0 : i32
    %c0_i32_2 = arith.constant 0 : i32
    return %c0_i32, %c0_i32_0, %c0_i32_1 : i32, i32, i32
  }
  func.func @transform_3(%arg0: i32) -> (i32, i32) {
    %c0_i32 = arith.constant 0 : i32
    %c0_i32_0 = arith.constant 0 : i32
    %c0_i32_1 = arith.constant 0 : i32
    return %c0_i32, %c0_i32_0 : i32, i32
  }
  func.func @transform_4(%arg0: i32) -> (i32, i32, i32) {
    %c0_i32 = arith.constant 0 : i32
    %c0_i32_0 = arith.constant 0 : i32
    %c0_i32_1 = arith.constant 0 : i32
    return %arg0, %c0_i32, %c0_i32_0 : i32, i32, i32
  }
  func.func @transform_5(%arg0: i32) -> (i32, i32, i32) {
    %c0_i32 = arith.constant 0 : i32
    %c0_i32_0 = arith.constant 0 : i32
    %c0_i32_1 = arith.constant 0 : i32
    %c0_i32_2 = arith.constant 0 : i32
    return %c0_i32, %c0_i32_0, %c0_i32_1 : i32, i32, i32
  }
  func.func @transform_6(%arg0: i32) -> (i32, i32, i32) {
    %c0_i32 = arith.constant 0 : i32
    %c0_i32_0 = arith.constant 0 : i32
    %c0_i32_1 = arith.constant 0 : i32
    %c0_i32_2 = arith.constant 0 : i32
    return %c0_i32, %c0_i32_0, %c0_i32_1 : i32, i32, i32
  }
}

</mosaic_0001>

<llo_original>
// kernel: decoder_forward.1
$region0: #{decoder_forward.1}
  #allocation0 [shape = 'u32[]', space=smem, size = 0x4, offset = 0x4, fixed_abs, tag = 'smem constant byte address 0x4 - core index']
  #allocation1 [shape = 'u32[144,128]{1,0:T(1,128)}', space=vmem, size = 0x12000, scoped, tag = 'internal scratch']
  %s0 = inlined_call_operand.vmem [shape: f32[1,8,128], index: 0, kind: input, shape index: {}]
  %s1 = inlined_call_operand.vmem [shape: f32[2,8,128], index: 1, kind: input, shape index: {}, may-alias: {1,5}]
  %s2 = inlined_call_operand.vmem [shape: f32[2,8,128], index: 2, kind: input, shape index: {}, may-alias: {2,6}]
  %s3 = inlined_call_operand.hbm [shape: f32[664,512], index: 3, kind: input, shape index: {}]
  %s4 = inlined_call_operand.vmem [shape: f32[1,8,128], index: 4, kind: output, shape index: {0}]
  %s5 = inlined_call_operand.vmem [shape: f32[2,8,128], index: 5, kind: output, shape index: {1}, may-alias: {1,5}]
  %s6 = inlined_call_operand.vmem [shape: f32[2,8,128], index: 6, kind: output, shape index: {2}, may-alias: {2,6}]
  %7 = xla_tuple %s4, %s5, %s6
  %s8 = sld [smem:[#allocation0]]
  $region50: #{decoder_forward.1} parent=0
    _
  %s10 = ssub.s32 1, %s8
  %s11 = scalar_select 0, %s10, %s8
  $region1: #{decoder_forward.1} parent=0
    #allocation2 [shape = 'u8[1359872]{0}', space=vmem, size = 0x14c000, scoped, tag = 'input window, operand 3, single buffered']
    #allocation3 [shape = 's32[1]{0}', space=sflag, size = 0x4, scoped, tag = 'scoped memory for decoder_forward.1']
    %12 = vsyncpa [#allocation3], 0
    // Predicated region
    $region2: #{decoder_forward.1} parent=1 // pred_check
      _
    $region3: #{decoder_forward.1} parent=1 // pred_check_branch
      %14 = sbr.rel (0) target = $region5
    $region4: #{decoder_forward.1} parent=1 // pred_region
      _
    $region5: #{decoder_forward.1} parent=1 // pred_fallthru
      _
    // Predicated region
    $region6: #{decoder_forward.1} parent=1 // pred_check
      _
    $region7: #{decoder_forward.1} parent=1 // pred_check_branch
      %16 = sbr.rel (0) target = $region9
    $region8: #{decoder_forward.1} parent=1 // pred_region
      _
    $region9: #{decoder_forward.1} parent=1 // pred_fallthru
      _
    // Predicated region
    $region10: #{decoder_forward.1} parent=1 // pred_check
      _
    $region11: #{decoder_forward.1} parent=1 // pred_check_branch
      %18 = sbr.rel (0) target = $region13
    $region12: #{decoder_forward.1} parent=1 // pred_region
      _
    $region13: #{decoder_forward.1} parent=1 // pred_fallthru
      _
    // Predicated region
    $region14: #{decoder_forward.1} parent=1 // pred_check
      _
    $region15: #{decoder_forward.1} parent=1 // pred_check_branch
      %20 = sbr.rel (0) target = $region17
    $region16: #{decoder_forward.1} parent=1 // pred_region
      %s22 = ssub.s32 42496, 42496
      %23 = vsyncadd [#allocation3], %s22
      %s24 = sshll.u32 [#allocation2], 4
      %s25 = int_to_ptr.vmem [resolvable:$true] %s24
      %30 = dma.hbm_to_vmem [thread:$0]  %s3, 42496, %s25, [#allocation3], 512, 512, 32
    $region17: #{decoder_forward.1} parent=1 // pred_fallthru
      _
    // Predicated region
    $region18: #{decoder_forward.1} parent=1 // pred_check
      _
    $region19: #{decoder_forward.1} parent=1 // pred_check_branch
      %32 = sbr.rel (0) target = $region21
    $region20: #{decoder_forward.1} parent=1 // pred_region
      %33 = dma.done [#allocation3], 42496
    $region21: #{decoder_forward.1} parent=1 // pred_fallthru
      _
    %p34 = scmp.eq.s32.totalorder 0, 0
    // Predicated region
    $region22: #{decoder_forward.1} parent=1 // pred_check
      %p35 = pneg %p34
    $region23: #{decoder_forward.1} parent=1 // pred_check_branch
      %37 = sbr.rel (%p35) target = $region25
    $region24: #{decoder_forward.1} parent=1 // pred_region
      %v38 = vld [vmem:[%s1] sm:$0xff]
      %v39 = vld [vmem:[%s1 + $0x8] sm:$0xff]
      %40 = vst [vmem:[%s5] sm:$0xff] %v38
      %41 = vst [vmem:[%s5 + $0x8] sm:$0xff] %v39
      %v42 = vld [vmem:[%s2] sm:$0xff]
      %v43 = vld [vmem:[%s2 + $0x8] sm:$0xff]
      %44 = vst [vmem:[%s6] sm:$0xff] %v42
      %45 = vst [vmem:[%s6 + $0x8] sm:$0xff] %v43
    $region25: #{decoder_forward.1} parent=1 // pred_fallthru
      _
    %v46 = vld [vmem:[%s0] sm:$0xff]
    %v47 = vld [vmem:[%s5] sm:$0xff]
    %v48 = vld [vmem:[%s6] sm:$0xff]
    %v49 = vld [vmem:[#allocation2] sm:$0xff]
    %v50 = vld [vmem:[#allocation2 + $0x8] sm:$0xff]
    %v51 = vld [vmem:[#allocation2 + $0x10] sm:$0xff]
    %v52 = vld [vmem:[#allocation2 + $0x18] sm:$0xff]
    %v53 = vld [vmem:[#allocation2 + $0x20] sm:$0xff]
    %v54 = vld [vmem:[#allocation2 + $0x28] sm:$0xff]
    %v55 = vld [vmem:[#allocation2 + $0x30] sm:$0xff]
    %v56 = vld [vmem:[#allocation2 + $0x38] sm:$0xff]
    %v57 = vld [vmem:[#allocation2 + $0x40] sm:$0xff]
    %v58 = vld [vmem:[#allocation2 + $0x48] sm:$0xff]
    %v59 = vld [vmem:[#allocation2 + $0x50] sm:$0xff]
    %v60 = vld [vmem:[#allocation2 + $0x58] sm:$0xff]
    %v61 = vld [vmem:[#allocation2 + $0x60] sm:$0xff]
    %v62 = vld [vmem:[#allocation2 + $0x68] sm:$0xff]
    %v63 = vld [vmem:[#allocation2 + $0x70] sm:$0xff]
    %v64 = vld [vmem:[#allocation2 + $0x78] sm:$0xff]
    %v65 = vld [vmem:[#allocation2 + $0x80] sm:$0xff]
    %v66 = vld [vmem:[#allocation2 + $0x88] sm:$0xff]
    %v67 = vld [vmem:[#allocation2 + $0x90] sm:$0xff]
    %v68 = vld [vmem:[#allocation2 + $0x98] sm:$0xff]
    %v69 = vld [vmem:[#allocation2 + $0xa0] sm:$0xff]
    %v70 = vld [vmem:[#allocation2 + $0xa8] sm:$0xff]
    %v71 = vld [vmem:[#allocation2 + $0xb0] sm:$0xff]
    %v72 = vld [vmem:[#allocation2 + $0xb8] sm:$0xff]
    %v73 = vld [vmem:[#allocation2 + $0xc0] sm:$0xff]
    %v74 = vld [vmem:[#allocation2 + $0xc8] sm:$0xff]
    %v75 = vld [vmem:[#allocation2 + $0xd0] sm:$0xff]
    %v76 = vld [vmem:[#allocation2 + $0xd8] sm:$0xff]
    %v77 = vld [vmem:[#allocation2 + $0xe0] sm:$0xff]
    %v78 = vld [vmem:[#allocation2 + $0xe8] sm:$0xff]
    %v79 = vld [vmem:[#allocation2 + $0xf0] sm:$0xff]
    %v80 = vld [vmem:[#allocation2 + $0xf8] sm:$0xff]
    %v81 = vld [vmem:[#allocation2 + $0x100] sm:$0xff]
    %v82 = vld [vmem:[#allocation2 + $0x108] sm:$0xff]
    %v83 = vld [vmem:[#allocation2 + $0x110] sm:$0xff]
    %v84 = vld [vmem:[#allocation2 + $0x118] sm:$0xff]
    %v85 = vld [vmem:[#allocation2 + $0x120] sm:$0xff]
    %v86 = vld [vmem:[#allocation2 + $0x128] sm:$0xff]
    %v87 = vld [vmem:[#allocation2 + $0x130] sm:$0xff]
    %v88 = vld [vmem:[#allocation2 + $0x138] sm:$0xff]
    %v89 = vld [vmem:[#allocation2 + $0x140] sm:$0xff]
    %v90 = vld [vmem:[#allocation2 + $0x148] sm:$0xff]
    %v91 = vld [vmem:[#allocation2 + $0x150] sm:$0xff]
    %v92 = vld [vmem:[#allocation2 + $0x158] sm:$0xff]
    %v93 = vld [vmem:[#allocation2 + $0x160] sm:$0xff]
    %v94 = vld [vmem:[#allocation2 + $0x168] sm:$0xff]
    %v95 = vld [vmem:[#allocation2 + $0x170] sm:$0xff]
    %v96 = vld [vmem:[#allocation2 + $0x178] sm:$0xff]
    %v97 = vld [vmem:[#allocation2 + $0x180] sm:$0xff]
    %v98 = vld [vmem:[#allocation2 + $0x188] sm:$0xff]
    %v99 = vld [vmem:[#allocation2 + $0x190] sm:$0xff]
    %v100 = vld [vmem:[#allocation2 + $0x198] sm:$0xff]
    %v101 = vld [vmem:[#allocation2 + $0x1a0] sm:$0xff]
    %v102 = vld [vmem:[#allocation2 + $0x1a8] sm:$0xff]
    %v103 = vld [vmem:[#allocation2 + $0x1b0] sm:$0xff]
    %v104 = vld [vmem:[#allocation2 + $0x1b8] sm:$0xff]
    %v105 = vld [vmem:[#allocation2 + $0x1c0] sm:$0xff]
    %v106 = vld [vmem:[#allocation2 + $0x1c8] sm:$0xff]
    %v107 = vld [vmem:[#allocation2 + $0x1d0] sm:$0xff]
    %v108 = vld [vmem:[#allocation2 + $0x1d8] sm:$0xff]
    %v109 = vld [vmem:[#allocation2 + $0x1e0] sm:$0xff]
    %v110 = vld [vmem:[#allocation2 + $0x1e8] sm:$0xff]
    %v111 = vld [vmem:[#allocation2 + $0x1f0] sm:$0xff]
    %v112 = vld [vmem:[#allocation2 + $0x1f8] sm:$0xff]
    %v113 = vld [vmem:[#allocation2 + $0x200] sm:$0xff]
    %v114 = vld [vmem:[#allocation2 + $0x208] sm:$0xff]
    %v115 = vld [vmem:[#allocation2 + $0x210] sm:$0xff]
    %v116 = vld [vmem:[#allocation2 + $0x218] sm:$0xff]
    %v117 = vld [vmem:[#allocation2 + $0x220] sm:$0xff]
    %v118 = vld [vmem:[#allocation2 + $0x228] sm:$0xff]
    %v119 = vld [vmem:[#allocation2 + $0x230] sm:$0xff]
    %v120 = vld [vmem:[#allocation2 + $0x238] sm:$0xff]
    %v121 = vld [vmem:[#allocation2 + $0x240] sm:$0xff]
    %v122 = vld [vmem:[#allocation2 + $0x248] sm:$0xff]
    %v123 = vld [vmem:[#allocation2 + $0x250] sm:$0xff]
    %v124 = vld [vmem:[#allocation2 + $0x258] sm:$0xff]
    %v125 = vld [vmem:[#allocation2 + $0x260] sm:$0xff]
    %v126 = vld [vmem:[#allocation2 + $0x268] sm:$0xff]
    %v127 = vld [vmem:[#allocation2 + $0x270] sm:$0xff]
    %v128 = vld [vmem:[#allocation2 + $0x278] sm:$0xff]
    %v129 = vld [vmem:[#allocation2 + $0x280] sm:$0xff]
    %v130 = vld [vmem:[#allocation2 + $0x288] sm:$0xff]
    %v131 = vld [vmem:[#allocation2 + $0x290] sm:$0xff]
    %v132 = vld [vmem:[#allocation2 + $0x298] sm:$0xff]
    %v133 = vld [vmem:[#allocation2 + $0x2a0] sm:$0xff]
    %v134 = vld [vmem:[#allocation2 + $0x2a8] sm:$0xff]
    %v135 = vld [vmem:[#allocation2 + $0x2b0] sm:$0xff]
    %v136 = vld [vmem:[#allocation2 + $0x2b8] sm:$0xff]
    %v137 = vld [vmem:[#allocation2 + $0x2c0] sm:$0xff]
    %v138 = vld [vmem:[#allocation2 + $0x2c8] sm:$0xff]
    %v139 = vld [vmem:[#allocation2 + $0x2d0] sm:$0xff]
    %v140 = vld [vmem:[#allocation2 + $0x2d8] sm:$0xff]
    %v141 = vld [vmem:[#allocation2 + $0x2e0] sm:$0xff]
    %v142 = vld [vmem:[#allocation2 + $0x2e8] sm:$0xff]
    %v143 = vld [vmem:[#allocation2 + $0x2f0] sm:$0xff]
    %v144 = vld [vmem:[#allocation2 + $0x2f8] sm:$0xff]
    %v145 = vld [vmem:[#allocation2 + $0x300] sm:$0xff]
    %v146 = vld [vmem:[#allocation2 + $0x308] sm:$0xff]
    %v147 = vld [vmem:[#allocation2 + $0x310] sm:$0xff]
    %v148 = vld [vmem:[#allocation2 + $0x318] sm:$0xff]
    %v149 = vld [vmem:[#allocation2 + $0x320] sm:$0xff]
    %v150 = vld [vmem:[#allocation2 + $0x328] sm:$0xff]
    %v151 = vld [vmem:[#allocation2 + $0x330] sm:$0xff]
    %v152 = vld [vmem:[#allocation2 + $0x338] sm:$0xff]
    %v153 = vld [vmem:[#allocation2 + $0x340] sm:$0xff]
    %v154 = vld [vmem:[#allocation2 + $0x348] sm:$0xff]
    %v155 = vld [vmem:[#allocation2 + $0x350] sm:$0xff]
    %v156 = vld [vmem:[#allocation2 + $0x358] sm:$0xff]
    %v157 = vld [vmem:[#allocation2 + $0x360] sm:$0xff]
    %v158 = vld [vmem:[#allocation2 + $0x368] sm:$0xff]
    %v159 = vld [vmem:[#allocation2 + $0x370] sm:$0xff]
    %v160 = vld [vmem:[#allocation2 + $0x378] sm:$0xff]
    %v161 = vld [vmem:[#allocation2 + $0x380] sm:$0xff]
    %v162 = vld [vmem:[#allocation2 + $0x388] sm:$0xff]
    %v163 = vld [vmem:[#allocation2 + $0x390] sm:$0xff]
    %v164 = vld [vmem:[#allocation2 + $0x398] sm:$0xff]
    %v165 = vld [vmem:[#allocation2 + $0x3a0] sm:$0xff]
    %v166 = vld [vmem:[#allocation2 + $0x3a8] sm:$0xff]
    %v167 = vld [vmem:[#allocation2 + $0x3b0] sm:$0xff]
    %v168 = vld [vmem:[#allocation2 + $0x3b8] sm:$0xff]
    %v169 = vld [vmem:[#allocation2 + $0x3c0] sm:$0xff]
    %v170 = vld [vmem:[#allocation2 + $0x3c8] sm:$0xff]
    %v171 = vld [vmem:[#allocation2 + $0x3d0] sm:$0xff]
    %v172 = vld [vmem:[#allocation2 + $0x3d8] sm:$0xff]
    %v173 = vld [vmem:[#allocation2 + $0x3e0] sm:$0xff]
    %v174 = vld [vmem:[#allocation2 + $0x3e8] sm:$0xff]
    %v175 = vld [vmem:[#allocation2 + $0x3f0] sm:$0xff]
    %v176 = vld [vmem:[#allocation2 + $0x3f8] sm:$0xff]
    %177 = vmatprep.subr.mxu0 %v114
    %178 = vmatpush1.msra.mxu0 %v113
    %179 = vmatprep.subr.mxu0 %v118
    %180 = vmatpush1.msra.mxu0 %v117
    %181 = vmatprep.subr.mxu0 %v122
    %182 = vmatpush1.msra.mxu0 %v121
    %183 = vmatprep.subr.mxu0 %v126
    %184 = vmatpush1.msra.mxu0 %v125
    %185 = vmatprep.subr.mxu0 %v130
    %186 = vmatpush1.msra.mxu0 %v129
    %187 = vmatprep.subr.mxu0 %v134
    %188 = vmatpush1.msra.mxu0 %v133
    %189 = vmatprep.subr.mxu0 %v138
    %190 = vmatpush1.msra.mxu0 %v137
    %191 = vmatprep.subr.mxu0 %v142
    %192 = vmatpush1.msra.mxu0 %v141
    %193 = vmatprep.subr.mxu0 %v146
    %194 = vmatpush1.msra.mxu0 %v145
    %195 = vmatprep.subr.mxu0 %v150
    %196 = vmatpush1.msra.mxu0 %v149
    %197 = vmatprep.subr.mxu0 %v154
    %198 = vmatpush1.msra.mxu0 %v153
    %199 = vmatprep.subr.mxu0 %v158
    %200 = vmatpush1.msra.mxu0 %v157
    %201 = vmatprep.subr.mxu0 %v162
    %202 = vmatpush1.msra.mxu0 %v161
    %203 = vmatprep.subr.mxu0 %v166
    %204 = vmatpush1.msra.mxu0 %v165
    %205 = vmatprep.subr.mxu0 %v170
    %206 = vmatpush1.msra.mxu0 %v169
    %207 = vmatprep.subr.mxu0 %v174
    %208 = vmatpush1.msra.mxu0 %v173
    %209 = vmatprep.subr.mxu0 0.0
    %210 = vmatpush1.msra.mxu0 0.0
    %211 = vmatprep.subr.mxu0 0.0
    %212 = vmatpush1.msra.mxu0 0.0
    %213 = vmatprep.subr.mxu0 0.0
    %214 = vmatpush1.msra.mxu0 0.0
    %215 = vmatprep.subr.mxu0 0.0
    %216 = vmatpush1.msra.mxu0 0.0
    %217 = vmatprep.subr.mxu0 0.0
    %218 = vmatpush1.msra.mxu0 0.0
    %219 = vmatprep.subr.mxu0 0.0
    %220 = vmatpush1.msra.mxu0 0.0
    %221 = vmatprep.subr.mxu0 0.0
    %222 = vmatpush1.msra.mxu0 0.0
    %223 = vmatprep.subr.mxu0 0.0
    %224 = vmatpush1.msra.mxu0 0.0
    %225 = vmatprep.subr.mxu0 0.0
    %226 = vmatpush1.msra.mxu0 0.0
    %227 = vmatprep.subr.mxu0 0.0
    %228 = vmatpush1.msra.mxu0 0.0
    %229 = vmatprep.subr.mxu0 0.0
    %230 = vmatpush1.msra.mxu0 0.0
    %231 = vmatprep.subr.mxu0 0.0
    %232 = vmatpush1.msra.mxu0 0.0
    %233 = vmatprep.subr.mxu0 0.0
    %234 = vmatpush1.msra.mxu0 0.0
    %235 = vmatprep.subr.mxu0 0.0
    %236 = vmatpush1.msra.mxu0 0.0
    %237 = vmatprep.subr.mxu0 0.0
    %238 = vmatpush1.msra.mxu0 0.0
    %239 = vmatprep.subr.mxu0 0.0
    %240 = vmatpush1.msra.mxu0 0.0
    %241 = vmatprep.mubr.f32.mxu0 0.0
    %242 = vmatmul.mubr.f32.gmra.mrb[0].mxu0 %v47
    %v243 = vpop.f32.mrb[0].mxu0
    %v244 = vadd.f32 0.0, %v243
    %v245 = vpop.f32.mrb[0].mxu0
    %v246 = vadd.f32 0.0, %v245
    %247 = vdwg.mxu0
    %248 = vmatprep.subr.mxu0 %v116
    %249 = vmatpush1.msra.mxu0 %v115
    %250 = vmatprep.subr.mxu0 %v120
    %251 = vmatpush1.msra.mxu0 %v119
    %252 = vmatprep.subr.mxu0 %v124
    %253 = vmatpush1.msra.mxu0 %v123
    %254 = vmatprep.subr.mxu0 %v128
    %255 = vmatpush1.msra.mxu0 %v127
    %256 = vmatprep.subr.mxu0 %v132
    %257 = vmatpush1.msra.mxu0 %v131
    %258 = vmatprep.subr.mxu0 %v136
    %259 = vmatpush1.msra.mxu0 %v135
    %260 = vmatprep.subr.mxu0 %v140
    %261 = vmatpush1.msra.mxu0 %v139
    %262 = vmatprep.subr.mxu0 %v144
    %263 = vmatpush1.msra.mxu0 %v143
    %264 = vmatprep.subr.mxu0 %v148
    %265 = vmatpush1.msra.mxu0 %v147
    %266 = vmatprep.subr.mxu0 %v152
    %267 = vmatpush1.msra.mxu0 %v151
    %268 = vmatprep.subr.mxu0 %v156
    %269 = vmatpush1.msra.mxu0 %v155
    %270 = vmatprep.subr.mxu0 %v160
    %271 = vmatpush1.msra.mxu0 %v159
    %272 = vmatprep.subr.mxu0 %v164
    %273 = vmatpush1.msra.mxu0 %v163
    %274 = vmatprep.subr.mxu0 %v168
    %275 = vmatpush1.msra.mxu0 %v167
    %276 = vmatprep.subr.mxu0 %v172
    %277 = vmatpush1.msra.mxu0 %v171
    %278 = vmatprep.subr.mxu0 %v176
    %279 = vmatpush1.msra.mxu0 %v175
    %280 = vmatprep.subr.mxu0 0.0
    %281 = vmatpush1.msra.mxu0 0.0
    %282 = vmatprep.subr.mxu0 0.0
    %283 = vmatpush1.msra.mxu0 0.0
    %284 = vmatprep.subr.mxu0 0.0
    %285 = vmatpush1.msra.mxu0 0.0
    %286 = vmatprep.subr.mxu0 0.0
    %287 = vmatpush1.msra.mxu0 0.0
    %288 = vmatprep.subr.mxu0 0.0
    %289 = vmatpush1.msra.mxu0 0.0
    %290 = vmatprep.subr.mxu0 0.0
    %291 = vmatpush1.msra.mxu0 0.0
    %292 = vmatprep.subr.mxu0 0.0
    %293 = vmatpush1.msra.mxu0 0.0
    %294 = vmatprep.subr.mxu0 0.0
    %295 = vmatpush1.msra.mxu0 0.0
    %296 = vmatprep.subr.mxu0 0.0
    %297 = vmatpush1.msra.mxu0 0.0
    %298 = vmatprep.subr.mxu0 0.0
    %299 = vmatpush1.msra.mxu0 0.0
    %300 = vmatprep.subr.mxu0 0.0
    %301 = vmatpush1.msra.mxu0 0.0
    %302 = vmatprep.subr.mxu0 0.0
    %303 = vmatpush1.msra.mxu0 0.0
    %304 = vmatprep.subr.mxu0 0.0
    %305 = vmatpush1.msra.mxu0 0.0
    %306 = vmatprep.subr.mxu0 0.0
    %307 = vmatpush1.msra.mxu0 0.0
    %308 = vmatprep.subr.mxu0 0.0
    %309 = vmatpush1.msra.mxu0 0.0
    %310 = vmatprep.subr.mxu0 0.0
    %311 = vmatpush1.msra.mxu0 0.0
    %312 = vmatprep.mubr.f32.mxu0 0.0
    %313 = vmatmul.mubr.f32.gmra.mrb[0].mxu0 %v47
    %v314 = vpop.f32.mrb[0].mxu0
    %v315 = vadd.f32 0.0, %v314
    %v316 = vpop.f32.mrb[0].mxu0
    %v317 = vadd.f32 0.0, %v316
    %318 = vdwg.mxu0
    %319 = vmatprep.subr.mxu0 %v50
    %320 = vmatpush1.msra.mxu0 %v49
    %321 = vmatprep.subr.mxu0 %v54
    %322 = vmatpush1.msra.mxu0 %v53
    %323 = vmatprep.subr.mxu0 %v58
    %324 = vmatpush1.msra.mxu0 %v57
    %325 = vmatprep.subr.mxu0 %v62
    %326 = vmatpush1.msra.mxu0 %v61
    %327 = vmatprep.subr.mxu0 %v66
    %328 = vmatpush1.msra.mxu0 %v65
    %329 = vmatprep.subr.mxu0 %v70
    %330 = vmatpush1.msra.mxu0 %v69
    %331 = vmatprep.subr.mxu0 %v74
    %332 = vmatpush1.msra.mxu0 %v73
    %333 = vmatprep.subr.mxu0 %v78
    %334 = vmatpush1.msra.mxu0 %v77
    %335 = vmatprep.subr.mxu0 %v82
    %336 = vmatpush1.msra.mxu0 %v81
    %337 = vmatprep.subr.mxu0 %v86
    %338 = vmatpush1.msra.mxu0 %v85
    %339 = vmatprep.subr.mxu0 %v90
    %340 = vmatpush1.msra.mxu0 %v89
    %341 = vmatprep.subr.mxu0 %v94
    %342 = vmatpush1.msra.mxu0 %v93
    %343 = vmatprep.subr.mxu0 %v98
    %344 = vmatpush1.msra.mxu0 %v97
    %345 = vmatprep.subr.mxu0 %v102
    %346 = vmatpush1.msra.mxu0 %v101
    %347 = vmatprep.subr.mxu0 %v106
    %348 = vmatpush1.msra.mxu0 %v105
    %349 = vmatprep.subr.mxu0 %v110
    %350 = vmatpush1.msra.mxu0 %v109
    %351 = vmatprep.subr.mxu0 0.0
    %352 = vmatpush1.msra.mxu0 0.0
    %353 = vmatprep.subr.mxu0 0.0
    %354 = vmatpush1.msra.mxu0 0.0
    %355 = vmatprep.subr.mxu0 0.0
    %356 = vmatpush1.msra.mxu0 0.0
    %357 = vmatprep.subr.mxu0 0.0
    %358 = vmatpush1.msra.mxu0 0.0
    %359 = vmatprep.subr.mxu0 0.0
    %360 = vmatpush1.msra.mxu0 0.0
    %361 = vmatprep.subr.mxu0 0.0
    %362 = vmatpush1.msra.mxu0 0.0
    %363 = vmatprep.subr.mxu0 0.0
    %364 = vmatpush1.msra.mxu0 0.0
    %365 = vmatprep.subr.mxu0 0.0
    %366 = vmatpush1.msra.mxu0 0.0
    %367 = vmatprep.subr.mxu0 0.0
    %368 = vmatpush1.msra.mxu0 0.0
    %369 = vmatprep.subr.mxu0 0.0
    %370 = vmatpush1.msra.mxu0 0.0
    %371 = vmatprep.subr.mxu0 0.0
    %372 = vmatpush1.msra.mxu0 0.0
    %373 = vmatprep.subr.mxu0 0.0
    %374 = vmatpush1.msra.mxu0 0.0
    %375 = vmatprep.subr.mxu0 0.0
    %376 = vmatpush1.msra.mxu0 0.0
    %377 = vmatprep.subr.mxu0 0.0
    %378 = vmatpush1.msra.mxu0 0.0
    %379 = vmatprep.subr.mxu0 0.0
    %380 = vmatpush1.msra.mxu0 0.0
    %381 = vmatprep.subr.mxu0 0.0
    %382 = vmatpush1.msra.mxu0 0.0
    %383 = vmatprep.mubr.f32.mxu0 0.0
    %384 = vmatmul.mubr.f32.gmra.mrb[0].mxu0 %v46
    %v385 = vpop.f32.mrb[0].mxu0
    %v386 = vadd.f32 %v244, %v385
    %v387 = vpop.f32.mrb[0].mxu0
    %v388 = vadd.f32 %v246, %v387
    %389 = vdwg.mxu0
    %390 = vmatprep.subr.mxu0 %v52
    %391 = vmatpush1.msra.mxu0 %v51
    %392 = vmatprep.subr.mxu0 %v56
    %393 = vmatpush1.msra.mxu0 %v55
    %394 = vmatprep.subr.mxu0 %v60
    %395 = vmatpush1.msra.mxu0 %v59
    %396 = vmatprep.subr.mxu0 %v64
    %397 = vmatpush1.msra.mxu0 %v63
    %398 = vmatprep.subr.mxu0 %v68
    %399 = vmatpush1.msra.mxu0 %v67
    %400 = vmatprep.subr.mxu0 %v72
    %401 = vmatpush1.msra.mxu0 %v71
    %402 = vmatprep.subr.mxu0 %v76
    %403 = vmatpush1.msra.mxu0 %v75
    %404 = vmatprep.subr.mxu0 %v80
    %405 = vmatpush1.msra.mxu0 %v79
    %406 = vmatprep.subr.mxu0 %v84
    %407 = vmatpush1.msra.mxu0 %v83
    %408 = vmatprep.subr.mxu0 %v88
    %409 = vmatpush1.msra.mxu0 %v87
    %410 = vmatprep.subr.mxu0 %v92
    %411 = vmatpush1.msra.mxu0 %v91
    %412 = vmatprep.subr.mxu0 %v96
    %413 = vmatpush1.msra.mxu0 %v95
    %414 = vmatprep.subr.mxu0 %v100
    %415 = vmatpush1.msra.mxu0 %v99
    %416 = vmatprep.subr.mxu0 %v104
    %417 = vmatpush1.msra.mxu0 %v103
    %418 = vmatprep.subr.mxu0 %v108
    %419 = vmatpush1.msra.mxu0 %v107
    %420 = vmatprep.subr.mxu0 %v112
    %421 = vmatpush1.msra.mxu0 %v111
    %422 = vmatprep.subr.mxu0 0.0
    %423 = vmatpush1.msra.mxu0 0.0
    %424 = vmatprep.subr.mxu0 0.0
    %425 = vmatpush1.msra.mxu0 0.0
    %426 = vmatprep.subr.mxu0 0.0
    %427 = vmatpush1.msra.mxu0 0.0
    %428 = vmatprep.subr.mxu0 0.0
    %429 = vmatpush1.msra.mxu0 0.0
    %430 = vmatprep.subr.mxu0 0.0
    %431 = vmatpush1.msra.mxu0 0.0
    %432 = vmatprep.subr.mxu0 0.0
    %433 = vmatpush1.msra.mxu0 0.0
    %434 = vmatprep.subr.mxu0 0.0
    %435 = vmatpush1.msra.mxu0 0.0
    %436 = vmatprep.subr.mxu0 0.0
    %437 = vmatpush1.msra.mxu0 0.0
    %438 = vmatprep.subr.mxu0 0.0
    %439 = vmatpush1.msra.mxu0 0.0
    %440 = vmatprep.subr.mxu0 0.0
    %441 = vmatpush1.msra.mxu0 0.0
    %442 = vmatprep.subr.mxu0 0.0
    %443 = vmatpush1.msra.mxu0 0.0
    %444 = vmatprep.subr.mxu0 0.0
    %445 = vmatpush1.msra.mxu0 0.0
    %446 = vmatprep.subr.mxu0 0.0
    %447 = vmatpush1.msra.mxu0 0.0
    %448 = vmatprep.subr.mxu0 0.0
    %449 = vmatpush1.msra.mxu0 0.0
    %450 = vmatprep.subr.mxu0 0.0
    %451 = vmatpush1.msra.mxu0 0.0
    %452 = vmatprep.subr.mxu0 0.0
    %453 = vmatpush1.msra.mxu0 0.0
    %454 = vmatprep.mubr.f32.mxu0 0.0
    %455 = vmatmul.mubr.f32.gmra.mrb[0].mxu0 %v46
    %v456 = vpop.f32.mrb[0].mxu0
    %v457 = vadd.f32 %v315, %v456
    %v458 = vpop.f32.mrb[0].mxu0
    %v459 = vadd.f32 %v317, %v458
    %460 = vdwg.mxu0
    %v461 = vld [vmem:[#allocation2 + $0x400] sm:$0xff]
    %v462 = vld [vmem:[#allocation2 + $0x408] sm:$0xff]
    %v463 = vld [vmem:[#allocation2 + $0x410] sm:$0xff]
    %v464 = vld [vmem:[#allocation2 + $0x418] sm:$0xff]
    %v465 = vadd.f32 %v386, %v461
    %v466 = vadd.f32 %v388, %v462
    %v467 = vadd.f32 %v457, %v463
    %v468 = vadd.f32 %v459, %v464
    %v469 = vxor.u32 %v465, 2147483648
    %v470 = vmul.f32 %v469, 1.442695
    %v471 = vpow.pop %v470
    %v472 = vadd.f32 %v471, 1.0
    %v473 = vrcp.pop %v472
    %v474 = vmul.f32 1.0, %v473
    %v475 = vxor.u32 %v466, 2147483648
    %v476 = vmul.f32 %v475, 1.442695
    %v477 = vpow.pop %v476
    %v478 = vadd.f32 %v477, 1.0
    %v479 = vrcp.pop %v478
    %v480 = vmul.f32 1.0, %v479
    %v481 = vtanh.pop %v467
    %v482 = vxor.u32 %v468, 2147483648
    %v483 = vmul.f32 %v482, 1.442695
    %v484 = vpow.pop %v483
    %v485 = vadd.f32 %v484, 1.0
    %v486 = vrcp.pop %v485
    %v487 = vmul.f32 1.0, %v486
    %v488 = vmul.f32 %v480, %v48
    %v489 = vmul.f32 %v474, %v481
    %v490 = vadd.f32 %v488, %v489
    %v491 = vtanh.pop %v490
    %v492 = vmul.f32 %v487, %v491
    %493 = vst [vmem:[%s5] sm:$0xff] %v492
    %494 = vst [vmem:[%s6] sm:$0xff] %v490
    %s495 = scalar_lea.vmem %s5, 8
    %v496 = vld [vmem:[%s495] sm:$0xff]
    %s497 = scalar_lea.vmem %s6, 8
    %v498 = vld [vmem:[%s497] sm:$0xff]
    %v499 = vld [vmem:[#allocation2 + $0x420] sm:$0xff]
    %v500 = vld [vmem:[#allocation2 + $0x428] sm:$0xff]
    %v501 = vld [vmem:[#allocation2 + $0x430] sm:$0xff]
    %v502 = vld [vmem:[#allocation2 + $0x438] sm:$0xff]
    %v503 = vld [vmem:[#allocation2 + $0x440] sm:$0xff]
    %v504 = vld [vmem:[#allocation2 + $0x448] sm:$0xff]
    %v505 = vld [vmem:[#allocation2 + $0x450] sm:$0xff]
    %v506 = vld [vmem:[#allocation2 + $0x458] sm:$0xff]
    %v507 = vld [vmem:[#allocation2 + $0x460] sm:$0xff]
    %v508 = vld [vmem:[#allocation2 + $0x468] sm:$0xff]
    %v509 = vld [vmem:[#allocation2 + $0x470] sm:$0xff]
    %v510 = vld [vmem:[#allocation2 + $0x478] sm:$0xff]
    %v511 = vld [vmem:[#allocation2 + $0x480] sm:$0xff]
    %v512 = vld [vmem:[#allocation2 + $0x488] sm:$0xff]
    %v513 = vld [vmem:[#allocation2 + $0x490] sm:$0xff]
    %v514 = vld [vmem:[#allocation2 + $0x498] sm:$0xff]
    %v515 = vld [vmem:[#allocation2 + $0x4a0] sm:$0xff]
    %v516 = vld [vmem:[#allocation2 + $0x4a8] sm:$0xff]
    %v517 = vld [vmem:[#allocation2 + $0x4b0] sm:$0xff]
    %v518 = vld [vmem:[#allocation2 + $0x4b8] sm:$0xff]
    %v519 = vld [vmem:[#allocation2 + $0x4c0] sm:$0xff]
    %v520 = vld [vmem:[#allocation2 + $0x4c8] sm:$0xff]
    %v521 = vld [vmem:[#allocation2 + $0x4d0] sm:$0xff]
    %v522 = vld [vmem:[#allocation2 + $0x4d8] sm:$0xff]
    %v523 = vld [vmem:[#allocation2 + $0x4e0] sm:$0xff]
    %v524 = vld [vmem:[#allocation2 + $0x4e8] sm:$0xff]
    %v525 = vld [vmem:[#allocation2 + $0x4f0] sm:$0xff]
    %v526 = vld [vmem:[#allocation2 + $0x4f8] sm:$0xff]
    %v527 = vld [vmem:[#allocation2 + $0x500] sm:$0xff]
    %v528 = vld [vmem:[#allocation2 + $0x508] sm:$0xff]
    %v529 = vld [vmem:[#allocation2 + $0x510] sm:$0xff]
    %v530 = vld [vmem:[#allocation2 + $0x518] sm:$0xff]
    %v531 = vld [vmem:[#allocation2 + $0x520] sm:$0xff]
    %v532 = vld [vmem:[#allocation2 + $0x528] sm:$0xff]
    %v533 = vld [vmem:[#allocation2 + $0x530] sm:$0xff]
    %v534 = vld [vmem:[#allocation2 + $0x538] sm:$0xff]
    %v535 = vld [vmem:[#allocation2 + $0x540] sm:$0xff]
    %v536 = vld [vmem:[#allocation2 + $0x548] sm:$0xff]
    %v537 = vld [vmem:[#allocation2 + $0x550] sm:$0xff]
    %v538 = vld [vmem:[#allocation2 + $0x558] sm:$0xff]
    %v539 = vld [vmem:[#allocation2 + $0x560] sm:$0xff]
    %v540 = vld [vmem:[#allocation2 + $0x568] sm:$0xff]
    %v541 = vld [vmem:[#allocation2 + $0x570] sm:$0xff]
    %v542 = vld [vmem:[#allocation2 + $0x578] sm:$0xff]
    %v543 = vld [vmem:[#allocation2 + $0x580] sm:$0xff]
    %v544 = vld [vmem:[#allocation2 + $0x588] sm:$0xff]
    %v545 = vld [vmem:[#allocation2 + $0x590] sm:$0xff]
    %v546 = vld [vmem:[#allocation2 + $0x598] sm:$0xff]
    %v547 = vld [vmem:[#allocation2 + $0x5a0] sm:$0xff]
    %v548 = vld [vmem:[#allocation2 + $0x5a8] sm:$0xff]
    %v549 = vld [vmem:[#allocation2 + $0x5b0] sm:$0xff]
    %v550 = vld [vmem:[#allocation2 + $0x5b8] sm:$0xff]
    %v551 = vld [vmem:[#allocation2 + $0x5c0] sm:$0xff]
    %v552 = vld [vmem:[#allocation2 + $0x5c8] sm:$0xff]
    %v553 = vld [vmem:[#allocation2 + $0x5d0] sm:$0xff]
    %v554 = vld [vmem:[#allocation2 + $0x5d8] sm:$0xff]
    %v555 = vld [vmem:[#allocation2 + $0x5e0] sm:$0xff]
    %v556 = vld [vmem:[#allocation2 + $0x5e8] sm:$0xff]
    %v557 = vld [vmem:[#allocation2 + $0x5f0] sm:$0xff]
    %v558 = vld [vmem:[#allocation2 + $0x5f8] sm:$0xff]
    %v559 = vld [vmem:[#allocation2 + $0x600] sm:$0xff]
    %v560 = vld [vmem:[#allocation2 + $0x608] sm:$0xff]
    %v561 = vld [vmem:[#allocation2 + $0x610] sm:$0xff]
    %v562 = vld [vmem:[#allocation2 + $0x618] sm:$0xff]
    %v563 = vld [vmem:[#allocation2 + $0x620] sm:$0xff]
    %v564 = vld [vmem:[#allocation2 + $0x628] sm:$0xff]
    %v565 = vld [vmem:[#allocation2 + $0x630] sm:$0xff]
    %v566 = vld [vmem:[#allocation2 + $0x638] sm:$0xff]
    %v567 = vld [vmem:[#allocation2 + $0x640] sm:$0xff]
    %v568 = vld [vmem:[#allocation2 + $0x648] sm:$0xff]
    %v569 = vld [vmem:[#allocation2 + $0x650] sm:$0xff]
    %v570 = vld [vmem:[#allocation2 + $0x658] sm:$0xff]
    %v571 = vld [vmem:[#allocation2 + $0x660] sm:$0xff]
    %v572 = vld [vmem:[#allocation2 + $0x668] sm:$0xff]
    %v573 = vld [vmem:[#allocation2 + $0x670] sm:$0xff]
    %v574 = vld [vmem:[#allocation2 + $0x678] sm:$0xff]
    %v575 = vld [vmem:[#allocation2 + $0x680] sm:$0xff]
    %v576 = vld [vmem:[#allocation2 + $0x688] sm:$0xff]
    %v577 = vld [vmem:[#allocation2 + $0x690] sm:$0xff]
    %v578 = vld [vmem:[#allocation2 + $0x698] sm:$0xff]
    %v579 = vld [vmem:[#allocation2 + $0x6a0] sm:$0xff]
    %v580 = vld [vmem:[#allocation2 + $0x6a8] sm:$0xff]
    %v581 = vld [vmem:[#allocation2 + $0x6b0] sm:$0xff]
    %v582 = vld [vmem:[#allocation2 + $0x6b8] sm:$0xff]
    %v583 = vld [vmem:[#allocation2 + $0x6c0] sm:$0xff]
    %v584 = vld [vmem:[#allocation2 + $0x6c8] sm:$0xff]
    %v585 = vld [vmem:[#allocation2 + $0x6d0] sm:$0xff]
    %v586 = vld [vmem:[#allocation2 + $0x6d8] sm:$0xff]
    %v587 = vld [vmem:[#allocation2 + $0x6e0] sm:$0xff]
    %v588 = vld [vmem:[#allocation2 + $0x6e8] sm:$0xff]
    %v589 = vld [vmem:[#allocation2 + $0x6f0] sm:$0xff]
    %v590 = vld [vmem:[#allocation2 + $0x6f8] sm:$0xff]
    %v591 = vld [vmem:[#allocation2 + $0x700] sm:$0xff]
    %v592 = vld [vmem:[#allocation2 + $0x708] sm:$0xff]
    %v593 = vld [vmem:[#allocation2 + $0x710] sm:$0xff]
    %v594 = vld [vmem:[#allocation2 + $0x718] sm:$0xff]
    %v595 = vld [vmem:[#allocation2 + $0x720] sm:$0xff]
    %v596 = vld [vmem:[#allocation2 + $0x728] sm:$0xff]
    %v597 = vld [vmem:[#allocation2 + $0x730] sm:$0xff]
    %v598 = vld [vmem:[#allocation2 + $0x738] sm:$0xff]
    %v599 = vld [vmem:[#allocation2 + $0x740] sm:$0xff]
    %v600 = vld [vmem:[#allocation2 + $0x748] sm:$0xff]
    %v601 = vld [vmem:[#allocation2 + $0x750] sm:$0xff]
    %v602 = vld [vmem:[#allocation2 + $0x758] sm:$0xff]
    %v603 = vld [vmem:[#allocation2 + $0x760] sm:$0xff]
    %v604 = vld [vmem:[#allocation2 + $0x768] sm:$0xff]
    %v605 = vld [vmem:[#allocation2 + $0x770] sm:$0xff]
    %v606 = vld [vmem:[#allocation2 + $0x778] sm:$0xff]
    %v607 = vld [vmem:[#allocation2 + $0x780] sm:$0xff]
    %v608 = vld [vmem:[#allocation2 + $0x788] sm:$0xff]
    %v609 = vld [vmem:[#allocation2 + $0x790] sm:$0xff]
    %v610 = vld [vmem:[#allocation2 + $0x798] sm:$0xff]
    %v611 = vld [vmem:[#allocation2 + $0x7a0] sm:$0xff]
    %v612 = vld [vmem:[#allocation2 + $0x7a8] sm:$0xff]
    %v613 = vld [vmem:[#allocation2 + $0x7b0] sm:$0xff]
    %v614 = vld [vmem:[#allocation2 + $0x7b8] sm:$0xff]
    %v615 = vld [vmem:[#allocation2 + $0x7c0] sm:$0xff]
    %v616 = vld [vmem:[#allocation2 + $0x7c8] sm:$0xff]
    %v617 = vld [vmem:[#allocation2 + $0x7d0] sm:$0xff]
    %v618 = vld [vmem:[#allocation2 + $0x7d8] sm:$0xff]
    %v619 = vld [vmem:[#allocation2 + $0x7e0] sm:$0xff]
    %v620 = vld [vmem:[#allocation2 + $0x7e8] sm:$0xff]
    %v621 = vld [vmem:[#allocation2 + $0x7f0] sm:$0xff]
    %v622 = vld [vmem:[#allocation2 + $0x7f8] sm:$0xff]
    %v623 = vld [vmem:[#allocation2 + $0x800] sm:$0xff]
    %v624 = vld [vmem:[#allocation2 + $0x808] sm:$0xff]
    %v625 = vld [vmem:[#allocation2 + $0x810] sm:$0xff]
    %v626 = vld [vmem:[#allocation2 + $0x818] sm:$0xff]
    %627 = vmatprep.subr.mxu0 %v564
    %628 = vmatpush1.msra.mxu0 %v563
    %629 = vmatprep.subr.mxu0 %v568
    %630 = vmatpush1.msra.mxu0 %v567
    %631 = vmatprep.subr.mxu0 %v572
    %632 = vmatpush1.msra.mxu0 %v571
    %633 = vmatprep.subr.mxu0 %v576
    %634 = vmatpush1.msra.mxu0 %v575
    %635 = vmatprep.subr.mxu0 %v580
    %636 = vmatpush1.msra.mxu0 %v579
    %637 = vmatprep.subr.mxu0 %v584
    %638 = vmatpush1.msra.mxu0 %v583
    %639 = vmatprep.subr.mxu0 %v588
    %640 = vmatpush1.msra.mxu0 %v587
    %641 = vmatprep.subr.mxu0 %v592
    %642 = vmatpush1.msra.mxu0 %v591
    %643 = vmatprep.subr.mxu0 %v596
    %644 = vmatpush1.msra.mxu0 %v595
    %645 = vmatprep.subr.mxu0 %v600
    %646 = vmatpush1.msra.mxu0 %v599
    %647 = vmatprep.subr.mxu0 %v604
    %648 = vmatpush1.msra.mxu0 %v603
    %649 = vmatprep.subr.mxu0 %v608
    %650 = vmatpush1.msra.mxu0 %v607
    %651 = vmatprep.subr.mxu0 %v612
    %652 = vmatpush1.msra.mxu0 %v611
    %653 = vmatprep.subr.mxu0 %v616
    %654 = vmatpush1.msra.mxu0 %v615
    %655 = vmatprep.subr.mxu0 %v620
    %656 = vmatpush1.msra.mxu0 %v619
    %657 = vmatprep.subr.mxu0 %v624
    %658 = vmatpush1.msra.mxu0 %v623
    %659 = vmatprep.subr.mxu0 0.0
    %660 = vmatpush1.msra.mxu0 0.0
    %661 = vmatprep.subr.mxu0 0.0
    %662 = vmatpush1.msra.mxu0 0.0
    %663 = vmatprep.subr.mxu0 0.0
    %664 = vmatpush1.msra.mxu0 0.0
    %665 = vmatprep.subr.mxu0 0.0
    %666 = vmatpush1.msra.mxu0 0.0
    %667 = vmatprep.subr.mxu0 0.0
    %668 = vmatpush1.msra.mxu0 0.0
    %669 = vmatprep.subr.mxu0 0.0
    %670 = vmatpush1.msra.mxu0 0.0
    %671 = vmatprep.subr.mxu0 0.0
    %672 = vmatpush1.msra.mxu0 0.0
    %673 = vmatprep.subr.mxu0 0.0
    %674 = vmatpush1.msra.mxu0 0.0
    %675 = vmatprep.subr.mxu0 0.0
    %676 = vmatpush1.msra.mxu0 0.0
    %677 = vmatprep.subr.mxu0 0.0
    %678 = vmatpush1.msra.mxu0 0.0
    %679 = vmatprep.subr.mxu0 0.0
    %680 = vmatpush1.msra.mxu0 0.0
    %681 = vmatprep.subr.mxu0 0.0
    %682 = vmatpush1.msra.mxu0 0.0
    %683 = vmatprep.subr.mxu0 0.0
    %684 = vmatpush1.msra.mxu0 0.0
    %685 = vmatprep.subr.mxu0 0.0
    %686 = vmatpush1.msra.mxu0 0.0
    %687 = vmatprep.subr.mxu0 0.0
    %688 = vmatpush1.msra.mxu0 0.0
    %689 = vmatprep.subr.mxu0 0.0
    %690 = vmatpush1.msra.mxu0 0.0
    %691 = vmatprep.mubr.f32.mxu0 0.0
    %692 = vmatmul.mubr.f32.gmra.mrb[0].mxu0 %v496
    %v693 = vpop.f32.mrb[0].mxu0
    %v694 = vadd.f32 0.0, %v693
    %v695 = vpop.f32.mrb[0].mxu0
    %v696 = vadd.f32 0.0, %v695
    %697 = vdwg.mxu0
    %698 = vmatprep.subr.mxu0 %v566
    %699 = vmatpush1.msra.mxu0 %v565
    %700 = vmatprep.subr.mxu0 %v570
    %701 = vmatpush1.msra.mxu0 %v569
    %702 = vmatprep.subr.mxu0 %v574
    %703 = vmatpush1.msra.mxu0 %v573
    %704 = vmatprep.subr.mxu0 %v578
    %705 = vmatpush1.msra.mxu0 %v577
    %706 = vmatprep.subr.mxu0 %v582
    %707 = vmatpush1.msra.mxu0 %v581
    %708 = vmatprep.subr.mxu0 %v586
    %709 = vmatpush1.msra.mxu0 %v585
    %710 = vmatprep.subr.mxu0 %v590
    %711 = vmatpush1.msra.mxu0 %v589
    %712 = vmatprep.subr.mxu0 %v594
    %713 = vmatpush1.msra.mxu0 %v593
    %714 = vmatprep.subr.mxu0 %v598
    %715 = vmatpush1.msra.mxu0 %v597
    %716 = vmatprep.subr.mxu0 %v602
    %717 = vmatpush1.msra.mxu0 %v601
    %718 = vmatprep.subr.mxu0 %v606
    %719 = vmatpush1.msra.mxu0 %v605
    %720 = vmatprep.subr.mxu0 %v610
    %721 = vmatpush1.msra.mxu0 %v609
    %722 = vmatprep.subr.mxu0 %v614
    %723 = vmatpush1.msra.mxu0 %v613
    %724 = vmatprep.subr.mxu0 %v618
    %725 = vmatpush1.msra.mxu0 %v617
    %726 = vmatprep.subr.mxu0 %v622
    %727 = vmatpush1.msra.mxu0 %v621
    %728 = vmatprep.subr.mxu0 %v626
    %729 = vmatpush1.msra.mxu0 %v625
    %730 = vmatprep.subr.mxu0 0.0
    %731 = vmatpush1.msra.mxu0 0.0
    %732 = vmatprep.subr.mxu0 0.0
    %733 = vmatpush1.msra.mxu0 0.0
    %734 = vmatprep.subr.mxu0 0.0
    %735 = vmatpush1.msra.mxu0 0.0
    %736 = vmatprep.subr.mxu0 0.0
    %737 = vmatpush1.msra.mxu0 0.0
    %738 = vmatprep.subr.mxu0 0.0
    %739 = vmatpush1.msra.mxu0 0.0
    %740 = vmatprep.subr.mxu0 0.0
    %741 = vmatpush1.msra.mxu0 0.0
    %742 = vmatprep.subr.mxu0 0.0
    %743 = vmatpush1.msra.mxu0 0.0
    %744 = vmatprep.subr.mxu0 0.0
    %745 = vmatpush1.msra.mxu0 0.0
    %746 = vmatprep.subr.mxu0 0.0
    %747 = vmatpush1.msra.mxu0 0.0
    %748 = vmatprep.subr.mxu0 0.0
    %749 = vmatpush1.msra.mxu0 0.0
    %750 = vmatprep.subr.mxu0 0.0
    %751 = vmatpush1.msra.mxu0 0.0
    %752 = vmatprep.subr.mxu0 0.0
    %753 = vmatpush1.msra.mxu0 0.0
    %754 = vmatprep.subr.mxu0 0.0
    %755 = vmatpush1.msra.mxu0 0.0
    %756 = vmatprep.subr.mxu0 0.0
    %757 = vmatpush1.msra.mxu0 0.0
    %758 = vmatprep.subr.mxu0 0.0
    %759 = vmatpush1.msra.mxu0 0.0
    %760 = vmatprep.subr.mxu0 0.0
    %761 = vmatpush1.msra.mxu0 0.0
    %762 = vmatprep.mubr.f32.mxu0 0.0
    %763 = vmatmul.mubr.f32.gmra.mrb[0].mxu0 %v496
    %v764 = vpop.f32.mrb[0].mxu0
    %v765 = vadd.f32 0.0, %v764
    %v766 = vpop.f32.mrb[0].mxu0
    %v767 = vadd.f32 0.0, %v766
    %768 = vdwg.mxu0
    %769 = vmatprep.subr.mxu0 %v500
    %770 = vmatpush1.msra.mxu0 %v499
    %771 = vmatprep.subr.mxu0 %v504
    %772 = vmatpush1.msra.mxu0 %v503
    %773 = vmatprep.subr.mxu0 %v508
    %774 = vmatpush1.msra.mxu0 %v507
    %775 = vmatprep.subr.mxu0 %v512
    %776 = vmatpush1.msra.mxu0 %v511
    %777 = vmatprep.subr.mxu0 %v516
    %778 = vmatpush1.msra.mxu0 %v515
    %779 = vmatprep.subr.mxu0 %v520
    %780 = vmatpush1.msra.mxu0 %v519
    %781 = vmatprep.subr.mxu0 %v524
    %782 = vmatpush1.msra.mxu0 %v523
    %783 = vmatprep.subr.mxu0 %v528
    %784 = vmatpush1.msra.mxu0 %v527
    %785 = vmatprep.subr.mxu0 %v532
    %786 = vmatpush1.msra.mxu0 %v531
    %787 = vmatprep.subr.mxu0 %v536
    %788 = vmatpush1.msra.mxu0 %v535
    %789 = vmatprep.subr.mxu0 %v540
    %790 = vmatpush1.msra.mxu0 %v539
    %791 = vmatprep.subr.mxu0 %v544
    %792 = vmatpush1.msra.mxu0 %v543
    %793 = vmatprep.subr.mxu0 %v548
    %794 = vmatpush1.msra.mxu0 %v547
    %795 = vmatprep.subr.mxu0 %v552
    %796 = vmatpush1.msra.mxu0 %v551
    %797 = vmatprep.subr.mxu0 %v556
    %798 = vmatpush1.msra.mxu0 %v555
    %799 = vmatprep.subr.mxu0 %v560
    %800 = vmatpush1.msra.mxu0 %v559
    %801 = vmatprep.subr.mxu0 0.0
    %802 = vmatpush1.msra.mxu0 0.0
    %803 = vmatprep.subr.mxu0 0.0
    %804 = vmatpush1.msra.mxu0 0.0
    %805 = vmatprep.subr.mxu0 0.0
    %806 = vmatpush1.msra.mxu0 0.0
    %807 = vmatprep.subr.mxu0 0.0
    %808 = vmatpush1.msra.mxu0 0.0
    %809 = vmatprep.subr.mxu0 0.0
    %810 = vmatpush1.msra.mxu0 0.0
    %811 = vmatprep.subr.mxu0 0.0
    %812 = vmatpush1.msra.mxu0 0.0
    %813 = vmatprep.subr.mxu0 0.0
    %814 = vmatpush1.msra.mxu0 0.0
    %815 = vmatprep.subr.mxu0 0.0
    %816 = vmatpush1.msra.mxu0 0.0
    %817 = vmatprep.subr.mxu0 0.0
    %818 = vmatpush1.msra.mxu0 0.0
    %819 = vmatprep.subr.mxu0 0.0
    %820 = vmatpush1.msra.mxu0 0.0
    %821 = vmatprep.subr.mxu0 0.0
    %822 = vmatpush1.msra.mxu0 0.0
    %823 = vmatprep.subr.mxu0 0.0
    %824 = vmatpush1.msra.mxu0 0.0
    %825 = vmatprep.subr.mxu0 0.0
    %826 = vmatpush1.msra.mxu0 0.0
    %827 = vmatprep.subr.mxu0 0.0
    %828 = vmatpush1.msra.mxu0 0.0
    %829 = vmatprep.subr.mxu0 0.0
    %830 = vmatpush1.msra.mxu0 0.0
    %831 = vmatprep.subr.mxu0 0.0
    %832 = vmatpush1.msra.mxu0 0.0
    %833 = vmatprep.mubr.f32.mxu0 0.0
    %834 = vmatmul.mubr.f32.gmra.mrb[0].mxu0 %v492
    %v835 = vpop.f32.mrb[0].mxu0
    %v836 = vadd.f32 %v694, %v835
    %v837 = vpop.f32.mrb[0].mxu0
    %v838 = vadd.f32 %v696, %v837
    %839 = vdwg.mxu0
    %840 = vmatprep.subr.mxu0 %v502
    %841 = vmatpush1.msra.mxu0 %v501
    %842 = vmatprep.subr.mxu0 %v506
    %843 = vmatpush1.msra.mxu0 %v505
    %844 = vmatprep.subr.mxu0 %v510
    %845 = vmatpush1.msra.mxu0 %v509
    %846 = vmatprep.subr.mxu0 %v514
    %847 = vmatpush1.msra.mxu0 %v513
    %848 = vmatprep.subr.mxu0 %v518
    %849 = vmatpush1.msra.mxu0 %v517
    %850 = vmatprep.subr.mxu0 %v522
    %851 = vmatpush1.msra.mxu0 %v521
    %852 = vmatprep.subr.mxu0 %v526
    %853 = vmatpush1.msra.mxu0 %v525
    %854 = vmatprep.subr.mxu0 %v530
    %855 = vmatpush1.msra.mxu0 %v529
    %856 = vmatprep.subr.mxu0 %v534
    %857 = vmatpush1.msra.mxu0 %v533
    %858 = vmatprep.subr.mxu0 %v538
    %859 = vmatpush1.msra.mxu0 %v537
    %860 = vmatprep.subr.mxu0 %v542
    %861 = vmatpush1.msra.mxu0 %v541
    %862 = vmatprep.subr.mxu0 %v546
    %863 = vmatpush1.msra.mxu0 %v545
    %864 = vmatprep.subr.mxu0 %v550
    %865 = vmatpush1.msra.mxu0 %v549
    %866 = vmatprep.subr.mxu0 %v554
    %867 = vmatpush1.msra.mxu0 %v553
    %868 = vmatprep.subr.mxu0 %v558
    %869 = vmatpush1.msra.mxu0 %v557
    %870 = vmatprep.subr.mxu0 %v562
    %871 = vmatpush1.msra.mxu0 %v561
    %872 = vmatprep.subr.mxu0 0.0
    %873 = vmatpush1.msra.mxu0 0.0
    %874 = vmatprep.subr.mxu0 0.0
    %875 = vmatpush1.msra.mxu0 0.0
    %876 = vmatprep.subr.mxu0 0.0
    %877 = vmatpush1.msra.mxu0 0.0
    %878 = vmatprep.subr.mxu0 0.0
    %879 = vmatpush1.msra.mxu0 0.0
    %880 = vmatprep.subr.mxu0 0.0
    %881 = vmatpush1.msra.mxu0 0.0
    %882 = vmatprep.subr.mxu0 0.0
    %883 = vmatpush1.msra.mxu0 0.0
    %884 = vmatprep.subr.mxu0 0.0
    %885 = vmatpush1.msra.mxu0 0.0
    %886 = vmatprep.subr.mxu0 0.0
    %887 = vmatpush1.msra.mxu0 0.0
    %888 = vmatprep.subr.mxu0 0.0
    %889 = vmatpush1.msra.mxu0 0.0
    %890 = vmatprep.subr.mxu0 0.0
    %891 = vmatpush1.msra.mxu0 0.0
    %892 = vmatprep.subr.mxu0 0.0
    %893 = vmatpush1.msra.mxu0 0.0
    %894 = vmatprep.subr.mxu0 0.0
    %895 = vmatpush1.msra.mxu0 0.0
    %896 = vmatprep.subr.mxu0 0.0
    %897 = vmatpush1.msra.mxu0 0.0
    %898 = vmatprep.subr.mxu0 0.0
    %899 = vmatpush1.msra.mxu0 0.0
    %900 = vmatprep.subr.mxu0 0.0
    %901 = vmatpush1.msra.mxu0 0.0
    %902 = vmatprep.subr.mxu0 0.0
    %903 = vmatpush1.msra.mxu0 0.0
    %904 = vmatprep.mubr.f32.mxu0 0.0
    %905 = vmatmul.mubr.f32.gmra.mrb[0].mxu0 %v492
    %v906 = vpop.f32.mrb[0].mxu0
    %v907 = vadd.f32 %v765, %v906
    %v908 = vpop.f32.mrb[0].mxu0
    %v909 = vadd.f32 %v767, %v908
    %910 = vdwg.mxu0
    %v911 = vld [vmem:[#allocation2 + $0x820] sm:$0xff]
    %v912 = vld [vmem:[#allocation2 + $0x828] sm:$0xff]
    %v913 = vld [vmem:[#allocation2 + $0x830] sm:$0xff]
    %v914 = vld [vmem:[#allocation2 + $0x838] sm:$0xff]
    %v915 = vadd.f32 %v836, %v911
    %v916 = vadd.f32 %v838, %v912
    %v917 = vadd.f32 %v907, %v913
    %v918 = vadd.f32 %v909, %v914
    %v919 = vxor.u32 %v915, 2147483648
    %v920 = vmul.f32 %v919, 1.442695
    %v921 = vpow.pop %v920
    %v922 = vadd.f32 %v921, 1.0
    %v923 = vrcp.pop %v922
    %v924 = vmul.f32 1.0, %v923
    %v925 = vxor.u32 %v916, 2147483648
    %v926 = vmul.f32 %v925, 1.442695
    %v927 = vpow.pop %v926
    %v928 = vadd.f32 %v927, 1.0
    %v929 = vrcp.pop %v928
    %v930 = vmul.f32 1.0, %v929
    %v931 = vtanh.pop %v917
    %v932 = vxor.u32 %v918, 2147483648
    %v933 = vmul.f32 %v932, 1.442695
    %v934 = vpow.pop %v933
    %v935 = vadd.f32 %v934, 1.0
    %v936 = vrcp.pop %v935
    %v937 = vmul.f32 1.0, %v936
    %v938 = vmul.f32 %v930, %v498
    %v939 = vmul.f32 %v924, %v931
    %v940 = vadd.f32 %v938, %v939
    %v941 = vtanh.pop %v940
    %v942 = vmul.f32 %v937, %v941
    %943 = vst [vmem:[%s495] sm:$0xff] %v942
    %944 = vst [vmem:[%s497] sm:$0xff] %v940
    %v945 = vld [vmem:[#allocation2 + $0x840] sm:$0xff]
    %v946 = vld [vmem:[#allocation2 + $0x848] sm:$0xff]
    %v947 = vld [vmem:[#allocation2 + $0x860] sm:$0xff]
    %v948 = vld [vmem:[#allocation2 + $0x868] sm:$0xff]
    %v949 = vld [vmem:[#allocation2 + $0x880] sm:$0xff]
    %v950 = vld [vmem:[#allocation2 + $0x888] sm:$0xff]
    %v951 = vld [vmem:[#allocation2 + $0x8a0] sm:$0xff]
    %v952 = vld [vmem:[#allocation2 + $0x8a8] sm:$0xff]
    %v953 = vld [vmem:[#allocation2 + $0x8c0] sm:$0xff]
    %v954 = vld [vmem:[#allocation2 + $0x8c8] sm:$0xff]
    %v955 = vld [vmem:[#allocation2 + $0x8e0] sm:$0xff]
    %v956 = vld [vmem:[#allocation2 + $0x8e8] sm:$0xff]
    %v957 = vld [vmem:[#allocation2 + $0x900] sm:$0xff]
    %v958 = vld [vmem:[#allocation2 + $0x908] sm:$0xff]
    %v959 = vld [vmem:[#allocation2 + $0x920] sm:$0xff]
    %v960 = vld [vmem:[#allocation2 + $0x928] sm:$0xff]
    %v961 = vld [vmem:[#allocation2 + $0x940] sm:$0xff]
    %v962 = vld [vmem:[#allocation2 + $0x948] sm:$0xff]
    %v963 = vld [vmem:[#allocation2 + $0x960] sm:$0xff]
    %v964 = vld [vmem:[#allocation2 + $0x968] sm:$0xff]
    %v965 = vld [vmem:[#allocation2 + $0x980] sm:$0xff]
    %v966 = vld [vmem:[#allocation2 + $0x988] sm:$0xff]
    %v967 = vld [vmem:[#allocation2 + $0x9a0] sm:$0xff]
    %v968 = vld [vmem:[#allocation2 + $0x9a8] sm:$0xff]
    %v969 = vld [vmem:[#allocation2 + $0x9c0] sm:$0xff]
    %v970 = vld [vmem:[#allocation2 + $0x9c8] sm:$0xff]
    %v971 = vld [vmem:[#allocation2 + $0x9e0] sm:$0xff]
    %v972 = vld [vmem:[#allocation2 + $0x9e8] sm:$0xff]
    %v973 = vld [vmem:[#allocation2 + $0xa00] sm:$0xff]
    %v974 = vld [vmem:[#allocation2 + $0xa08] sm:$0xff]
    %v975 = vld [vmem:[#allocation2 + $0xa20] sm:$0xff]
    %v976 = vld [vmem:[#allocation2 + $0xa28] sm:$0xff]
    %v977 = vld [vmem:[#allocation2 + $0xa40] sm:$0xff]
    %978 = vmatprep.subr.mxu0 %v946
    %979 = vmatpush1.msra.mxu0 %v945
    %980 = vmatprep.subr.mxu0 %v948
    %981 = vmatpush1.msra.mxu0 %v947
    %982 = vmatprep.subr.mxu0 %v950
    %983 = vmatpush1.msra.mxu0 %v949
    %984 = vmatprep.subr.mxu0 %v952
    %985 = vmatpush1.msra.mxu0 %v951
    %986 = vmatprep.subr.mxu0 %v954
    %987 = vmatpush1.msra.mxu0 %v953
    %988 = vmatprep.subr.mxu0 %v956
    %989 = vmatpush1.msra.mxu0 %v955
    %990 = vmatprep.subr.mxu0 %v958
    %991 = vmatpush1.msra.mxu0 %v957
    %992 = vmatprep.subr.mxu0 %v960
    %993 = vmatpush1.msra.mxu0 %v959
    %994 = vmatprep.subr.mxu0 %v962
    %995 = vmatpush1.msra.mxu0 %v961
    %996 = vmatprep.subr.mxu0 %v964
    %997 = vmatpush1.msra.mxu0 %v963
    %998 = vmatprep.subr.mxu0 %v966
    %999 = vmatpush1.msra.mxu0 %v965
    %1000 = vmatprep.subr.mxu0 %v968
    %1001 = vmatpush1.msra.mxu0 %v967
    %1002 = vmatprep.subr.mxu0 %v970
    %1003 = vmatpush1.msra.mxu0 %v969
    %1004 = vmatprep.subr.mxu0 %v972
    %1005 = vmatpush1.msra.mxu0 %v971
    %1006 = vmatprep.subr.mxu0 %v974
    %1007 = vmatpush1.msra.mxu0 %v973
    %1008 = vmatprep.subr.mxu0 %v976
    %1009 = vmatpush1.msra.mxu0 %v975
    %1010 = vmatprep.subr.mxu0 0.0
    %1011 = vmatpush1.msra.mxu0 0.0
    %1012 = vmatprep.subr.mxu0 0.0
    %1013 = vmatpush1.msra.mxu0 0.0
    %1014 = vmatprep.subr.mxu0 0.0
    %1015 = vmatpush1.msra.mxu0 0.0
    %1016 = vmatprep.subr.mxu0 0.0
    %1017 = vmatpush1.msra.mxu0 0.0
    %1018 = vmatprep.subr.mxu0 0.0
    %1019 = vmatpush1.msra.mxu0 0.0
    %1020 = vmatprep.subr.mxu0 0.0
    %1021 = vmatpush1.msra.mxu0 0.0
    %1022 = vmatprep.subr.mxu0 0.0
    %1023 = vmatpush1.msra.mxu0 0.0
    %1024 = vmatprep.subr.mxu0 0.0
    %1025 = vmatpush1.msra.mxu0 0.0
    %1026 = vmatprep.subr.mxu0 0.0
    %1027 = vmatpush1.msra.mxu0 0.0
    %1028 = vmatprep.subr.mxu0 0.0
    %1029 = vmatpush1.msra.mxu0 0.0
    %1030 = vmatprep.subr.mxu0 0.0
    %1031 = vmatpush1.msra.mxu0 0.0
    %1032 = vmatprep.subr.mxu0 0.0
    %1033 = vmatpush1.msra.mxu0 0.0
    %1034 = vmatprep.subr.mxu0 0.0
    %1035 = vmatpush1.msra.mxu0 0.0
    %1036 = vmatprep.subr.mxu0 0.0
    %1037 = vmatpush1.msra.mxu0 0.0
    %1038 = vmatprep.subr.mxu0 0.0
    %1039 = vmatpush1.msra.mxu0 0.0
    %1040 = vmatprep.subr.mxu0 0.0
    %1041 = vmatpush1.msra.mxu0 0.0
    %1042 = vmatprep.mubr.f32.mxu0 0.0
    %1043 = vmatmul.mubr.f32.gmra.mrb[0].mxu0 %v942
    %v1044 = vpop.f32.mrb[0].mxu0
    %v1045 = vadd.f32 %v977, %v1044
    %v1046 = vpop.f32.mrb[0].mxu0
    %1047 = vdwg.mxu0
    %1048 = vst [vmem:[%s4] sm:$0xff] %v1045
    // Predicated region
    $region26: #{decoder_forward.1} parent=1 // pred_check
      _
    $region27: #{decoder_forward.1} parent=1 // pred_check_branch
      %1050 = sbr.rel (0) target = $region29
    $region28: #{decoder_forward.1} parent=1 // pred_region
      _
    $region29: #{decoder_forward.1} parent=1 // pred_fallthru
      _
    // Predicated region
    $region30: #{decoder_forward.1} parent=1 // pred_check
      _
    $region31: #{decoder_forward.1} parent=1 // pred_check_branch
      %1052 = sbr.rel (0) target = $region33
    $region32: #{decoder_forward.1} parent=1 // pred_region
      _
    $region33: #{decoder_forward.1} parent=1 // pred_fallthru
      _
    // Predicated region
    $region34: #{decoder_forward.1} parent=1 // pred_check
      _
    $region35: #{decoder_forward.1} parent=1 // pred_check_branch
      %1054 = sbr.rel (0) target = $region37
    $region36: #{decoder_forward.1} parent=1 // pred_region
      _
    $region37: #{decoder_forward.1} parent=1 // pred_fallthru
      _
    // Predicated region
    $region38: #{decoder_forward.1} parent=1 // pred_check
      _
    $region39: #{decoder_forward.1} parent=1 // pred_check_branch
      %1056 = sbr.rel (0) target = $region41
    $region40: #{decoder_forward.1} parent=1 // pred_region
      _
    $region41: #{decoder_forward.1} parent=1 // pred_fallthru
      _
    // Predicated region
    $region42: #{decoder_forward.1} parent=1 // pred_check
      _
    $region43: #{decoder_forward.1} parent=1 // pred_check_branch
      %1058 = sbr.rel (0) target = $region45
    $region44: #{decoder_forward.1} parent=1 // pred_region
      _
    $region45: #{decoder_forward.1} parent=1 // pred_fallthru
      _
    // Predicated region
    $region46: #{decoder_forward.1} parent=1 // pred_check
      _
    $region47: #{decoder_forward.1} parent=1 // pred_check_branch
      %1060 = sbr.rel (0) target = $region49
    $region48: #{decoder_forward.1} parent=1 // pred_region
      _
    $region49: #{decoder_forward.1} parent=1 // pred_fallthru
      _
    %1061 = vsyncpa [#allocation3], 1

</llo_original>
